<compile_context>
chip_gen: v6e
topology: v6e:2x2x1
jax: 0.10.0
libtpu: 0.0.40
codegen_flags: <defaults>
</compile_context>

<pallas_src>
import functools

import jax
import jax.numpy as jnp
import numpy as np
from jax.experimental import pallas as pl
from jax.experimental.pallas import tpu as pltpu

# Padded feature sizes (multiples of 128).
D_IN = 896    # 784 -> 896
D_H1 = 384    # 300 -> 384
D_H2 = 128    # 100 -> 128
D_OUT = 128   # 10  -> 128


def _pad2d(a, rows, cols):
    r, c = a.shape
    return jnp.pad(a, ((0, rows - r), (0, cols - c)))


def lenet300_kernel(
    x_ref,        # (TB, D_IN)    batch tile of flattened, padded input
    w1_ref,       # (D_IN, D_H1)  W1.T, zero padded
    b1_ref,       # (1, D_H1)
    w2_ref,       # (D_H1, D_H2)  W2.T, zero padded
    b2_ref,       # (1, D_H2)
    w3_ref,       # (D_H2, D_OUT) W3.T, zero padded
    b3_ref,       # (1, D_OUT)
    fc1_out_ref,  # (TB, D_H1)
    fc2_in_ref,   # (TB, D_H1)
    fc2_out_ref,  # (TB, D_H2)
    fc3_in_ref,   # (TB, D_H2)
    fc3_out_ref,  # (TB, D_OUT)
):
    x = x_ref[...]                                                       # (TB, D_IN)

    # fc1: h1 = x @ W1.T   (padded cols of W1.T are zero -> padded h1 cols are 0)
    h1 = jnp.dot(x, w1_ref[...], preferred_element_type=jnp.float32)     # (TB, D_H1)
    fc1_out_ref[...] = h1

    # relu(h1 + b1); bias (1, D_H1) broadcasts over the batch sublanes.
    a1 = jnp.maximum(h1 + b1_ref[...], 0.0)
    fc2_in_ref[...] = a1

    # fc2
    h2 = jnp.dot(a1, w2_ref[...], preferred_element_type=jnp.float32)    # (TB, D_H2)
    fc2_out_ref[...] = h2

    a2 = jnp.maximum(h2 + b2_ref[...], 0.0)
    fc3_in_ref[...] = a2

    # fc3 (+ bias)
    h3 = jnp.dot(a2, w3_ref[...], preferred_element_type=jnp.float32) + b3_ref[...]
    fc3_out_ref[...] = h3


@functools.partial(jax.jit, static_argnames=())
def _forward_jit(x2, params):
    """x2: (B, 784) float32.  Returns the batch-major padded kernel outputs plus
    the de-padded, feature-major dict matching the PyTorch module."""
    w1, b1, w2, b2, w3, b3 = params
    B = x2.shape[0]

    # Batch tiling: TB <= 512, padded to a multiple of 8.
    TB = 512 if B >= 512 else max(8, ((B + 7) // 8) * 8)
    B_pad = ((B + TB - 1) // TB) * TB
    grid = (B_pad // TB,)

    # Pad input and weights/biases to lane-friendly sizes (zeros are inert).
    x_p = _pad2d(x2, B_pad, D_IN)                         # (B_pad, D_IN)
    w1t = _pad2d(w1.T.astype(jnp.float32), D_IN, D_H1)    # (D_IN, D_H1)
    w2t = _pad2d(w2.T.astype(jnp.float32), D_H1, D_H2)    # (D_H1, D_H2)
    w3t = _pad2d(w3.T.astype(jnp.float32), D_H2, D_OUT)   # (D_H2, D_OUT)
    b1p = _pad2d(b1.reshape(1, -1).astype(jnp.float32), 1, D_H1)
    b2p = _pad2d(b2.reshape(1, -1).astype(jnp.float32), 1, D_H2)
    b3p = _pad2d(b3.reshape(1, -1).astype(jnp.float32), 1, D_OUT)

    out_shape = (
        jax.ShapeDtypeStruct((B_pad, D_H1), jnp.float32),   # fc1_out (batch-major)
        jax.ShapeDtypeStruct((B_pad, D_H1), jnp.float32),   # fc2_in
        jax.ShapeDtypeStruct((B_pad, D_H2), jnp.float32),   # fc2_out
        jax.ShapeDtypeStruct((B_pad, D_H2), jnp.float32),   # fc3_in
        jax.ShapeDtypeStruct((B_pad, D_OUT), jnp.float32),  # fc3_out
    )

    # Weights/biases: constant index_map -> resident in VMEM across grid steps.
    const = lambda shape: pl.BlockSpec(shape, lambda i: (0, 0))
    tile = lambda feat: pl.BlockSpec((TB, feat), lambda i: (i, 0))

    outs = pl.pallas_call(
        lenet300_kernel,
        out_shape=out_shape,
        grid=grid,
        in_specs=[
            tile(D_IN),                 # x
            const((D_IN, D_H1)),        # W1.T
            const((1, D_H1)),           # b1
            const((D_H1, D_H2)),        # W2.T
            const((1, D_H2)),           # b2
            const((D_H2, D_OUT)),       # W3.T
            const((1, D_OUT)),          # b3
        ],
        out_specs=(
            tile(D_H1), tile(D_H1), tile(D_H2), tile(D_H2), tile(D_OUT),
        ),
        compiler_params=pltpu.CompilerParams(
            dimension_semantics=("parallel",),
        ),
    )(x_p, w1t, b1p, w2t, b2p, w3t, b3p)

    fc1_out_b, fc2_in_b, fc2_out_b, fc3_in_b, fc3_out_b = outs

    # Slice off padding and transpose to the module's feature-major layout
    # (fused XLA ops under jit; not worth doing inside the kernel since the
    # true feature counts (300/100/10) are not (8,128)-tileable).
    return {
        "fc1_in": x2.T,                              # (784, B) -- pure copy of input
        "fc1_out": fc1_out_b[:B, :300].T,            # (300, B)
        "fc2_in": fc2_in_b[:B, :300].T,              # (300, B)
        "fc2_out": fc2_out_b[:B, :100].T,            # (100, B)
        "fc3_in": fc3_in_b[:B, :100].T,              # (100, B)
        "fc3_out": fc3_out_b[:B, :10].T,             # (10, B)
    }


def lenet300_forward(x, params):
    """x: (B, 1, 28, 28) or (B, 784).  Returns the same dict (same shapes,
    feature-major) as the PyTorch module."""
    x2 = x.reshape(-1, 784).astype(jnp.float32)
    return _forward_jit(x2, params)


def init_params(key):
    """Deterministic synthetic parameters matching nn.Linear(784,300)/(300,100)/(100,10)."""
    ks = jax.random.split(key, 6)

    def linear(kw, kb, fan_out, fan_in):
        bound = 1.0 / np.sqrt(fan_in)
        w = jax.random.uniform(kw, (fan_out, fan_in), jnp.float32, -bound, bound)
        b = jax.random.uniform(kb, (fan_out,), jnp.float32, -bound, bound)
        return w, b

    w1, b1 = linear(ks[0], ks[1], 300, 784)
    w2, b2 = linear(ks[2], ks[3], 100, 300)
    w3, b3 = linear(ks[4], ks[5], 10, 100)
    return (w1, b1, w2, b2, w3, b3)


def reference_forward(x, params):
    """Pure-JAX reference mirroring the torch forward exactly."""
    w1, b1, w2, b2, w3, b3 = params
    fc1_in = x.reshape(-1, 784).T
    fc1_out = w1 @ fc1_in
    fc2_in = jnp.maximum(fc1_out + b1[:, None], 0.0)
    fc2_out = w2 @ fc2_in
    fc3_in = jnp.maximum(fc2_out + b2[:, None], 0.0)
    fc3_out = w3 @ fc3_in + b3[:, None]
    return {"fc1_in": fc1_in, "fc1_out": fc1_out, "fc2_in": fc2_in,
            "fc2_out": fc2_out, "fc3_in": fc3_in, "fc3_out": fc3_out}


if __name__ == "__main__":
    key = jax.random.PRNGKey(0)
    k_x, k_p = jax.random.split(key)

    # Small MNIST-like batch: NCHW (2, 1, 28, 28) -> flattens to (2, 784).
    x = jax.random.normal(k_x, (2, 1, 28, 28), jnp.float32)
    params = init_params(k_p)

    out = lenet300_forward(x, params)
    out = jax.tree_util.tree_map(jax.block_until_ready, out)

    ref = reference_forward(x, params)
    for name in ("fc1_in", "fc1_out", "fc2_in", "fc2_out", "fc3_in", "fc3_out"):
        np.testing.assert_allclose(np.asarray(out[name]), np.asarray(ref[name]),
                                   rtol=1e-5, atol=1e-4)

    print("KERNEL_OK")
</pallas_src>

<mosaic_0001>
module attributes {stable_mosaic.version = 11 : i64} {
  func.func @lenet300_kernel(%arg0: i32, %arg1: memref<8x896xf32, #tpu.memory_space<vmem>>, %arg2: memref<896x384xf32, #tpu.memory_space<vmem>>, %arg3: memref<1x384xf32, #tpu.memory_space<vmem>>, %arg4: memref<384x128xf32, #tpu.memory_space<vmem>>, %arg5: memref<1x128xf32, #tpu.memory_space<vmem>>, %arg6: memref<128x128xf32, #tpu.memory_space<vmem>>, %arg7: memref<1x128xf32, #tpu.memory_space<vmem>>, %arg8: memref<8x384xf32, #tpu.memory_space<vmem>>, %arg9: memref<8x384xf32, #tpu.memory_space<vmem>>, %arg10: memref<8x128xf32, #tpu.memory_space<vmem>>, %arg11: memref<8x128xf32, #tpu.memory_space<vmem>>, %arg12: memref<8x128xf32, #tpu.memory_space<vmem>>) attributes {dimension_semantics = [#tpu.dimension_semantics<parallel>], iteration_bounds = array<i64: 1>, scalar_prefetch = 0 : i64, scratch_operands = 0 : i64, tpu.core_type = #tpu.core_type<tc>, window_params = [{transform_indices = @transform_0, window_bounds = array<i64: 8, 896>}, {pipeline_mode = #tpu.pipeline_mode<synchronous>, transform_indices = @transform_1, window_bounds = array<i64: 896, 384>}, {pipeline_mode = #tpu.pipeline_mode<synchronous>, transform_indices = @transform_2, window_bounds = array<i64: 1, 384>}, {pipeline_mode = #tpu.pipeline_mode<synchronous>, transform_indices = @transform_3, window_bounds = array<i64: 384, 128>}, {pipeline_mode = #tpu.pipeline_mode<synchronous>, transform_indices = @transform_4, window_bounds = array<i64: 1, 128>}, {pipeline_mode = #tpu.pipeline_mode<synchronous>, transform_indices = @transform_5, window_bounds = array<i64: 128, 128>}, {pipeline_mode = #tpu.pipeline_mode<synchronous>, transform_indices = @transform_6, window_bounds = array<i64: 1, 128>}, {transform_indices = @transform_7, window_bounds = array<i64: 8, 384>}, {transform_indices = @transform_8, window_bounds = array<i64: 8, 384>}, {transform_indices = @transform_9, window_bounds = array<i64: 8, 128>}, {transform_indices = @transform_10, window_bounds = array<i64: 8, 128>}, {transform_indices = @transform_11, window_bounds = array<i64: 8, 128>}]} {
    %c0 = arith.constant 0 : index
    %c0_0 = arith.constant 0 : index
    %0 = vector.load %arg1[%c0, %c0_0] : memref<8x896xf32, #tpu.memory_space<vmem>>, vector<8x896xf32>
    %c0_1 = arith.constant 0 : index
    %c0_2 = arith.constant 0 : index
    %1 = vector.load %arg2[%c0_1, %c0_2] : memref<896x384xf32, #tpu.memory_space<vmem>>, vector<896x384xf32>
    %cst = arith.constant dense<0.000000e+00> : vector<8x384xf32>
    %2 = tpu.matmul %0, %1, %cst {dimension_numbers = #tpu.dot_dimension_numbers<[1], [0], [0], [1], [0, 0, 1, 1], [], []>} : vector<8x896xf32>, vector<896x384xf32>, vector<8x384xf32> -> vector<8x384xf32>
    %c0_3 = arith.constant 0 : index
    %c0_4 = arith.constant 0 : index
    %3 = vector.load %arg8[%c0_3, %c0_4] : memref<8x384xf32, #tpu.memory_space<vmem>>, vector<8x384xf32>
    tpu.vector_store %arg8[%c0_3, %c0_4], %2 {strides = array<i32>} : memref<8x384xf32, #tpu.memory_space<vmem>>, vector<8x384xf32>,
    %c0_5 = arith.constant 0 : index
    %c0_6 = arith.constant 0 : index
    %4 = vector.load %arg3[%c0_5, %c0_6] : memref<1x384xf32, #tpu.memory_space<vmem>>, vector<1x384xf32>
    %5 = vector.broadcast %4 : vector<1x384xf32> to vector<8x384xf32>
    %6 = arith.addf %2, %5 : vector<8x384xf32>
    %cst_7 = arith.constant 0.000000e+00 : f32
    %7 = vector.broadcast %cst_7 : f32 to vector<8x384xf32>
    %8 = arith.maximumf %6, %7 : vector<8x384xf32>
    %c0_8 = arith.constant 0 : index
    %c0_9 = arith.constant 0 : index
    %9 = vector.load %arg9[%c0_8, %c0_9] : memref<8x384xf32, #tpu.memory_space<vmem>>, vector<8x384xf32>
    tpu.vector_store %arg9[%c0_8, %c0_9], %8 {strides = array<i32>} : memref<8x384xf32, #tpu.memory_space<vmem>>, vector<8x384xf32>,
    %c0_10 = arith.constant 0 : index
    %c0_11 = arith.constant 0 : index
    %10 = vector.load %arg4[%c0_10, %c0_11] : memref<384x128xf32, #tpu.memory_space<vmem>>, vector<384x128xf32>
    %cst_12 = arith.constant dense<0.000000e+00> : vector<8x128xf32>
    %11 = tpu.matmul %8, %10, %cst_12 {dimension_numbers = #tpu.dot_dimension_numbers<[1], [0], [0], [1], [0, 0, 1, 1], [], []>} : vector<8x384xf32>, vector<384x128xf32>, vector<8x128xf32> -> vector<8x128xf32>
    %c0_13 = arith.constant 0 : index
    %c0_14 = arith.constant 0 : index
    %12 = vector.load %arg10[%c0_13, %c0_14] : memref<8x128xf32, #tpu.memory_space<vmem>>, vector<8x128xf32>
    tpu.vector_store %arg10[%c0_13, %c0_14], %11 {strides = array<i32>} : memref<8x128xf32, #tpu.memory_space<vmem>>, vector<8x128xf32>,
    %c0_15 = arith.constant 0 : index
    %c0_16 = arith.constant 0 : index
    %13 = vector.load %arg5[%c0_15, %c0_16] : memref<1x128xf32, #tpu.memory_space<vmem>>, vector<1x128xf32>
    %14 = vector.broadcast %13 : vector<1x128xf32> to vector<8x128xf32>
    %15 = arith.addf %11, %14 : vector<8x128xf32>
    %cst_17 = arith.constant 0.000000e+00 : f32
    %16 = vector.broadcast %cst_17 : f32 to vector<8x128xf32>
    %17 = arith.maximumf %15, %16 : vector<8x128xf32>
    %c0_18 = arith.constant 0 : index
    %c0_19 = arith.constant 0 : index
    %18 = vector.load %arg11[%c0_18, %c0_19] : memref<8x128xf32, #tpu.memory_space<vmem>>, vector<8x128xf32>
    tpu.vector_store %arg11[%c0_18, %c0_19], %17 {strides = array<i32>} : memref<8x128xf32, #tpu.memory_space<vmem>>, vector<8x128xf32>,
    %c0_20 = arith.constant 0 : index
    %c0_21 = arith.constant 0 : index
    %19 = vector.load %arg6[%c0_20, %c0_21] : memref<128x128xf32, #tpu.memory_space<vmem>>, vector<128x128xf32>
    %cst_22 = arith.constant dense<0.000000e+00> : vector<8x128xf32>
    %20 = tpu.matmul %17, %19, %cst_22 {dimension_numbers = #tpu.dot_dimension_numbers<[1], [0], [0], [1], [0, 0, 1, 1], [], []>} : vector<8x128xf32>, vector<128x128xf32>, vector<8x128xf32> -> vector<8x128xf32>
    %c0_23 = arith.constant 0 : index
    %c0_24 = arith.constant 0 : index
    %21 = vector.load %arg7[%c0_23, %c0_24] : memref<1x128xf32, #tpu.memory_space<vmem>>, vector<1x128xf32>
    %22 = vector.broadcast %21 : vector<1x128xf32> to vector<8x128xf32>
    %23 = arith.addf %20, %22 : vector<8x128xf32>
    %c0_25 = arith.constant 0 : index
    %c0_26 = arith.constant 0 : index
    %24 = vector.load %arg12[%c0_25, %c0_26] : memref<8x128xf32, #tpu.memory_space<vmem>>, vector<8x128xf32>
    tpu.vector_store %arg12[%c0_25, %c0_26], %23 {strides = array<i32>} : memref<8x128xf32, #tpu.memory_space<vmem>>, vector<8x128xf32>,
    return
  }
  func.func @transform_0(%arg0: i32) -> (i32, i32) {
    %c0_i32 = arith.constant 0 : i32
    %c0_i32_0 = arith.constant 0 : i32
    return %arg0, %c0_i32 : i32, i32
  }
  func.func @transform_1(%arg0: i32) -> (i32, i32) {
    %c0_i32 = arith.constant 0 : i32
    %c0_i32_0 = arith.constant 0 : i32
    %c0_i32_1 = arith.constant 0 : i32
    return %c0_i32, %c0_i32_0 : i32, i32
  }
  func.func @transform_2(%arg0: i32) -> (i32, i32) {
    %c0_i32 = arith.constant 0 : i32
    %c0_i32_0 = arith.constant 0 : i32
    %c0_i32_1 = arith.constant 0 : i32
    return %c0_i32, %c0_i32_0 : i32, i32
  }
  func.func @transform_3(%arg0: i32) -> (i32, i32) {
    %c0_i32 = arith.constant 0 : i32
    %c0_i32_0 = arith.constant 0 : i32
    %c0_i32_1 = arith.constant 0 : i32
    return %c0_i32, %c0_i32_0 : i32, i32
  }
  func.func @transform_4(%arg0: i32) -> (i32, i32) {
    %c0_i32 = arith.constant 0 : i32
    %c0_i32_0 = arith.constant 0 : i32
    %c0_i32_1 = arith.constant 0 : i32
    return %c0_i32, %c0_i32_0 : i32, i32
  }
  func.func @transform_5(%arg0: i32) -> (i32, i32) {
    %c0_i32 = arith.constant 0 : i32
    %c0_i32_0 = arith.constant 0 : i32
    %c0_i32_1 = arith.constant 0 : i32
    return %c0_i32, %c0_i32_0 : i32, i32
  }
  func.func @transform_6(%arg0: i32) -> (i32, i32) {
    %c0_i32 = arith.constant 0 : i32
    %c0_i32_0 = arith.constant 0 : i32
    %c0_i32_1 = arith.constant 0 : i32
    return %c0_i32, %c0_i32_0 : i32, i32
  }
  func.func @transform_7(%arg0: i32) -> (i32, i32) {
    %c0_i32 = arith.constant 0 : i32
    %c0_i32_0 = arith.constant 0 : i32
    return %arg0, %c0_i32 : i32, i32
  }
  func.func @transform_8(%arg0: i32) -> (i32, i32) {
    %c0_i32 = arith.constant 0 : i32
    %c0_i32_0 = arith.constant 0 : i32
    return %arg0, %c0_i32 : i32, i32
  }
  func.func @transform_9(%arg0: i32) -> (i32, i32) {
    %c0_i32 = arith.constant 0 : i32
    %c0_i32_0 = arith.constant 0 : i32
    return %arg0, %c0_i32 : i32, i32
  }
  func.func @transform_10(%arg0: i32) -> (i32, i32) {
    %c0_i32 = arith.constant 0 : i32
    %c0_i32_0 = arith.constant 0 : i32
    return %arg0, %c0_i32 : i32, i32
  }
  func.func @transform_11(%arg0: i32) -> (i32, i32) {
    %c0_i32 = arith.constant 0 : i32
    %c0_i32_0 = arith.constant 0 : i32
    return %arg0, %c0_i32 : i32, i32
  }
}

</mosaic_0001>

<llo_original>
// kernel: _forward_jit.1
$region0: #{_forward_jit.1}
  #allocation0 [shape = 'u32[]', space=smem, size = 0x4, offset = 0x4, fixed_abs, tag = 'smem constant byte address 0x4 - core index']
  #allocation1 [shape = 'u32[144,128]{1,0:T(1,128)}', space=vmem, size = 0x12000, scoped, tag = 'internal scratch']
  %s0 = inlined_call_operand.vmem [shape: f32[8,896], index: 0, kind: input, shape index: {}]
  %s1 = inlined_call_operand.vmem [shape: f32[896,384], index: 1, kind: input, shape index: {}]
  %s2 = inlined_call_operand.vmem [shape: f32[1,384], index: 2, kind: input, shape index: {}]
  %s3 = inlined_call_operand.vmem [shape: f32[384,128], index: 3, kind: input, shape index: {}]
  %s4 = inlined_call_operand.vmem [shape: f32[1,128], index: 4, kind: input, shape index: {}]
  %s5 = inlined_call_operand.vmem [shape: f32[128,128], index: 5, kind: input, shape index: {}]
  %s6 = inlined_call_operand.vmem [shape: f32[1,128], index: 6, kind: input, shape index: {}]
  %s7 = inlined_call_operand.vmem [shape: f32[8,384], index: 7, kind: output, shape index: {0}]
  %s8 = inlined_call_operand.vmem [shape: f32[8,384], index: 8, kind: output, shape index: {1}]
  %s9 = inlined_call_operand.vmem [shape: f32[8,128], index: 9, kind: output, shape index: {2}]
  %s10 = inlined_call_operand.vmem [shape: f32[8,128], index: 10, kind: output, shape index: {3}]
  %s11 = inlined_call_operand.vmem [shape: f32[8,128], index: 11, kind: output, shape index: {4}]
  %12 = xla_tuple %s7, %s8, %s9, %s10, %s11
  %s13 = sld [smem:[#allocation0]]
  $region70: #{_forward_jit.1} parent=0
    _
  %s15 = ssub.s32 1, %s13
  %s16 = scalar_select 0, %s15, %s13
  // Predicated region
  $region2: #{_forward_jit.1} parent=0 // pred_check
    _
  $region3: #{_forward_jit.1} parent=0 // pred_check_branch
    %18 = sbr.rel (0) target = $region5
  $region4: #{_forward_jit.1} parent=0 // pred_region
    _
  $region5: #{_forward_jit.1} parent=0 // pred_fallthru
    _
  // Predicated region
  $region6: #{_forward_jit.1} parent=0 // pred_check
    _
  $region7: #{_forward_jit.1} parent=0 // pred_check_branch
    %20 = sbr.rel (0) target = $region9
  $region8: #{_forward_jit.1} parent=0 // pred_region
    _
  $region9: #{_forward_jit.1} parent=0 // pred_fallthru
    _
  // Predicated region
  $region10: #{_forward_jit.1} parent=0 // pred_check
    _
  $region11: #{_forward_jit.1} parent=0 // pred_check_branch
    %22 = sbr.rel (0) target = $region13
  $region12: #{_forward_jit.1} parent=0 // pred_region
    _
  $region13: #{_forward_jit.1} parent=0 // pred_fallthru
    _
  // Predicated region
  $region14: #{_forward_jit.1} parent=0 // pred_check
    _
  $region15: #{_forward_jit.1} parent=0 // pred_check_branch
    %24 = sbr.rel (0) target = $region17
  $region16: #{_forward_jit.1} parent=0 // pred_region
    _
  $region17: #{_forward_jit.1} parent=0 // pred_fallthru
    _
  // Predicated region
  $region18: #{_forward_jit.1} parent=0 // pred_check
    _
  $region19: #{_forward_jit.1} parent=0 // pred_check_branch
    %26 = sbr.rel (0) target = $region21
  $region20: #{_forward_jit.1} parent=0 // pred_region
    _
  $region21: #{_forward_jit.1} parent=0 // pred_fallthru
    _
  // Predicated region
  $region22: #{_forward_jit.1} parent=0 // pred_check
    _
  $region23: #{_forward_jit.1} parent=0 // pred_check_branch
    %28 = sbr.rel (0) target = $region25
  $region24: #{_forward_jit.1} parent=0 // pred_region
    _
  $region25: #{_forward_jit.1} parent=0 // pred_fallthru
    _
  // Predicated region
  $region26: #{_forward_jit.1} parent=0 // pred_check
    _
  $region27: #{_forward_jit.1} parent=0 // pred_check_branch
    %30 = sbr.rel (0) target = $region29
  $region28: #{_forward_jit.1} parent=0 // pred_region
    _
  $region29: #{_forward_jit.1} parent=0 // pred_fallthru
    _
  %v31 = vld [vmem:[%s0] sm:$0xff]
  %v32 = vld [vmem:[%s0 + $0x8] sm:$0xff]
  %v33 = vld [vmem:[%s0 + $0x10] sm:$0xff]
  %v34 = vld [vmem:[%s0 + $0x18] sm:$0xff]
  %v35 = vld [vmem:[%s0 + $0x20] sm:$0xff]
  %v36 = vld [vmem:[%s0 + $0x28] sm:$0xff]
  %v37 = vld [vmem:[%s0 + $0x30] sm:$0xff]
  %v38 = vld [vmem:[%s1] sm:$0xff]
  %v39 = vld [vmem:[%s1 + $0x8] sm:$0xff]
  %v40 = vld [vmem:[%s1 + $0x10] sm:$0xff]
  %v41 = vld [vmem:[%s1 + $0x18] sm:$0xff]
  %v42 = vld [vmem:[%s1 + $0x20] sm:$0xff]
  %v43 = vld [vmem:[%s1 + $0x28] sm:$0xff]
  %v44 = vld [vmem:[%s1 + $0x30] sm:$0xff]
  %v45 = vld [vmem:[%s1 + $0x38] sm:$0xff]
  %v46 = vld [vmem:[%s1 + $0x40] sm:$0xff]
  %v47 = vld [vmem:[%s1 + $0x48] sm:$0xff]
  %v48 = vld [vmem:[%s1 + $0x50] sm:$0xff]
  %v49 = vld [vmem:[%s1 + $0x58] sm:$0xff]
  %v50 = vld [vmem:[%s1 + $0x60] sm:$0xff]
  %v51 = vld [vmem:[%s1 + $0x68] sm:$0xff]
  %v52 = vld [vmem:[%s1 + $0x70] sm:$0xff]
  %v53 = vld [vmem:[%s1 + $0x78] sm:$0xff]
  %v54 = vld [vmem:[%s1 + $0x80] sm:$0xff]
  %v55 = vld [vmem:[%s1 + $0x88] sm:$0xff]
  %v56 = vld [vmem:[%s1 + $0x90] sm:$0xff]
  %v57 = vld [vmem:[%s1 + $0x98] sm:$0xff]
  %v58 = vld [vmem:[%s1 + $0xa0] sm:$0xff]
  %v59 = vld [vmem:[%s1 + $0xa8] sm:$0xff]
  %v60 = vld [vmem:[%s1 + $0xb0] sm:$0xff]
  %v61 = vld [vmem:[%s1 + $0xb8] sm:$0xff]
  %v62 = vld [vmem:[%s1 + $0xc0] sm:$0xff]
  %v63 = vld [vmem:[%s1 + $0xc8] sm:$0xff]
  %v64 = vld [vmem:[%s1 + $0xd0] sm:$0xff]
  %v65 = vld [vmem:[%s1 + $0xd8] sm:$0xff]
  %v66 = vld [vmem:[%s1 + $0xe0] sm:$0xff]
  %v67 = vld [vmem:[%s1 + $0xe8] sm:$0xff]
  %v68 = vld [vmem:[%s1 + $0xf0] sm:$0xff]
  %v69 = vld [vmem:[%s1 + $0xf8] sm:$0xff]
  %v70 = vld [vmem:[%s1 + $0x100] sm:$0xff]
  %v71 = vld [vmem:[%s1 + $0x108] sm:$0xff]
  %v72 = vld [vmem:[%s1 + $0x110] sm:$0xff]
  %v73 = vld [vmem:[%s1 + $0x118] sm:$0xff]
  %v74 = vld [vmem:[%s1 + $0x120] sm:$0xff]
  %v75 = vld [vmem:[%s1 + $0x128] sm:$0xff]
  %v76 = vld [vmem:[%s1 + $0x130] sm:$0xff]
  %v77 = vld [vmem:[%s1 + $0x138] sm:$0xff]
  %v78 = vld [vmem:[%s1 + $0x140] sm:$0xff]
  %v79 = vld [vmem:[%s1 + $0x148] sm:$0xff]
  %v80 = vld [vmem:[%s1 + $0x150] sm:$0xff]
  %v81 = vld [vmem:[%s1 + $0x158] sm:$0xff]
  %v82 = vld [vmem:[%s1 + $0x160] sm:$0xff]
  %v83 = vld [vmem:[%s1 + $0x168] sm:$0xff]
  %v84 = vld [vmem:[%s1 + $0x170] sm:$0xff]
  %v85 = vld [vmem:[%s1 + $0x178] sm:$0xff]
  %v86 = vld [vmem:[%s1 + $0x180] sm:$0xff]
  %v87 = vld [vmem:[%s1 + $0x188] sm:$0xff]
  %v88 = vld [vmem:[%s1 + $0x190] sm:$0xff]
  %v89 = vld [vmem:[%s1 + $0x198] sm:$0xff]
  %v90 = vld [vmem:[%s1 + $0x1a0] sm:$0xff]
  %v91 = vld [vmem:[%s1 + $0x1a8] sm:$0xff]
  %v92 = vld [vmem:[%s1 + $0x1b0] sm:$0xff]
  %v93 = vld [vmem:[%s1 + $0x1b8] sm:$0xff]
  %v94 = vld [vmem:[%s1 + $0x1c0] sm:$0xff]
  %v95 = vld [vmem:[%s1 + $0x1c8] sm:$0xff]
  %v96 = vld [vmem:[%s1 + $0x1d0] sm:$0xff]
  %v97 = vld [vmem:[%s1 + $0x1d8] sm:$0xff]
  %v98 = vld [vmem:[%s1 + $0x1e0] sm:$0xff]
  %v99 = vld [vmem:[%s1 + $0x1e8] sm:$0xff]
  %v100 = vld [vmem:[%s1 + $0x1f0] sm:$0xff]
  %v101 = vld [vmem:[%s1 + $0x1f8] sm:$0xff]
  %v102 = vld [vmem:[%s1 + $0x200] sm:$0xff]
  %v103 = vld [vmem:[%s1 + $0x208] sm:$0xff]
  %v104 = vld [vmem:[%s1 + $0x210] sm:$0xff]
  %v105 = vld [vmem:[%s1 + $0x218] sm:$0xff]
  %v106 = vld [vmem:[%s1 + $0x220] sm:$0xff]
  %v107 = vld [vmem:[%s1 + $0x228] sm:$0xff]
  %v108 = vld [vmem:[%s1 + $0x230] sm:$0xff]
  %v109 = vld [vmem:[%s1 + $0x238] sm:$0xff]
  %v110 = vld [vmem:[%s1 + $0x240] sm:$0xff]
  %v111 = vld [vmem:[%s1 + $0x248] sm:$0xff]
  %v112 = vld [vmem:[%s1 + $0x250] sm:$0xff]
  %v113 = vld [vmem:[%s1 + $0x258] sm:$0xff]
  %v114 = vld [vmem:[%s1 + $0x260] sm:$0xff]
  %v115 = vld [vmem:[%s1 + $0x268] sm:$0xff]
  %v116 = vld [vmem:[%s1 + $0x270] sm:$0xff]
  %v117 = vld [vmem:[%s1 + $0x278] sm:$0xff]
  %v118 = vld [vmem:[%s1 + $0x280] sm:$0xff]
  %v119 = vld [vmem:[%s1 + $0x288] sm:$0xff]
  %v120 = vld [vmem:[%s1 + $0x290] sm:$0xff]
  %v121 = vld [vmem:[%s1 + $0x298] sm:$0xff]
  %v122 = vld [vmem:[%s1 + $0x2a0] sm:$0xff]
  %v123 = vld [vmem:[%s1 + $0x2a8] sm:$0xff]
  %v124 = vld [vmem:[%s1 + $0x2b0] sm:$0xff]
  %v125 = vld [vmem:[%s1 + $0x2b8] sm:$0xff]
  %v126 = vld [vmem:[%s1 + $0x2c0] sm:$0xff]
  %v127 = vld [vmem:[%s1 + $0x2c8] sm:$0xff]
  %v128 = vld [vmem:[%s1 + $0x2d0] sm:$0xff]
  %v129 = vld [vmem:[%s1 + $0x2d8] sm:$0xff]
  %v130 = vld [vmem:[%s1 + $0x2e0] sm:$0xff]
  %v131 = vld [vmem:[%s1 + $0x2e8] sm:$0xff]
  %v132 = vld [vmem:[%s1 + $0x2f0] sm:$0xff]
  %v133 = vld [vmem:[%s1 + $0x2f8] sm:$0xff]
  %v134 = vld [vmem:[%s1 + $0x300] sm:$0xff]
  %v135 = vld [vmem:[%s1 + $0x308] sm:$0xff]
  %v136 = vld [vmem:[%s1 + $0x310] sm:$0xff]
  %v137 = vld [vmem:[%s1 + $0x318] sm:$0xff]
  %v138 = vld [vmem:[%s1 + $0x320] sm:$0xff]
  %v139 = vld [vmem:[%s1 + $0x328] sm:$0xff]
  %v140 = vld [vmem:[%s1 + $0x330] sm:$0xff]
  %v141 = vld [vmem:[%s1 + $0x338] sm:$0xff]
  %v142 = vld [vmem:[%s1 + $0x340] sm:$0xff]
  %v143 = vld [vmem:[%s1 + $0x348] sm:$0xff]
  %v144 = vld [vmem:[%s1 + $0x350] sm:$0xff]
  %v145 = vld [vmem:[%s1 + $0x358] sm:$0xff]
  %v146 = vld [vmem:[%s1 + $0x360] sm:$0xff]
  %v147 = vld [vmem:[%s1 + $0x368] sm:$0xff]
  %v148 = vld [vmem:[%s1 + $0x370] sm:$0xff]
  %v149 = vld [vmem:[%s1 + $0x378] sm:$0xff]
  %v150 = vld [vmem:[%s1 + $0x380] sm:$0xff]
  %v151 = vld [vmem:[%s1 + $0x388] sm:$0xff]
  %v152 = vld [vmem:[%s1 + $0x390] sm:$0xff]
  %v153 = vld [vmem:[%s1 + $0x398] sm:$0xff]
  %v154 = vld [vmem:[%s1 + $0x3a0] sm:$0xff]
  %v155 = vld [vmem:[%s1 + $0x3a8] sm:$0xff]
  %v156 = vld [vmem:[%s1 + $0x3b0] sm:$0xff]
  %v157 = vld [vmem:[%s1 + $0x3b8] sm:$0xff]
  %v158 = vld [vmem:[%s1 + $0x3c0] sm:$0xff]
  %v159 = vld [vmem:[%s1 + $0x3c8] sm:$0xff]
  %v160 = vld [vmem:[%s1 + $0x3d0] sm:$0xff]
  %v161 = vld [vmem:[%s1 + $0x3d8] sm:$0xff]
  %v162 = vld [vmem:[%s1 + $0x3e0] sm:$0xff]
  %v163 = vld [vmem:[%s1 + $0x3e8] sm:$0xff]
  %v164 = vld [vmem:[%s1 + $0x3f0] sm:$0xff]
  %v165 = vld [vmem:[%s1 + $0x3f8] sm:$0xff]
  %v166 = vld [vmem:[%s1 + $0x400] sm:$0xff]
  %v167 = vld [vmem:[%s1 + $0x408] sm:$0xff]
  %v168 = vld [vmem:[%s1 + $0x410] sm:$0xff]
  %v169 = vld [vmem:[%s1 + $0x418] sm:$0xff]
  %v170 = vld [vmem:[%s1 + $0x420] sm:$0xff]
  %v171 = vld [vmem:[%s1 + $0x428] sm:$0xff]
  %v172 = vld [vmem:[%s1 + $0x430] sm:$0xff]
  %v173 = vld [vmem:[%s1 + $0x438] sm:$0xff]
  %v174 = vld [vmem:[%s1 + $0x440] sm:$0xff]
  %v175 = vld [vmem:[%s1 + $0x448] sm:$0xff]
  %v176 = vld [vmem:[%s1 + $0x450] sm:$0xff]
  %v177 = vld [vmem:[%s1 + $0x458] sm:$0xff]
  %v178 = vld [vmem:[%s1 + $0x460] sm:$0xff]
  %v179 = vld [vmem:[%s1 + $0x468] sm:$0xff]
  %v180 = vld [vmem:[%s1 + $0x470] sm:$0xff]
  %v181 = vld [vmem:[%s1 + $0x478] sm:$0xff]
  %v182 = vld [vmem:[%s1 + $0x480] sm:$0xff]
  %v183 = vld [vmem:[%s1 + $0x488] sm:$0xff]
  %v184 = vld [vmem:[%s1 + $0x490] sm:$0xff]
  %v185 = vld [vmem:[%s1 + $0x498] sm:$0xff]
  %v186 = vld [vmem:[%s1 + $0x4a0] sm:$0xff]
  %v187 = vld [vmem:[%s1 + $0x4a8] sm:$0xff]
  %v188 = vld [vmem:[%s1 + $0x4b0] sm:$0xff]
  %v189 = vld [vmem:[%s1 + $0x4b8] sm:$0xff]
  %v190 = vld [vmem:[%s1 + $0x4c0] sm:$0xff]
  %v191 = vld [vmem:[%s1 + $0x4c8] sm:$0xff]
  %v192 = vld [vmem:[%s1 + $0x4d0] sm:$0xff]
  %v193 = vld [vmem:[%s1 + $0x4d8] sm:$0xff]
  %v194 = vld [vmem:[%s1 + $0x4e0] sm:$0xff]
  %v195 = vld [vmem:[%s1 + $0x4e8] sm:$0xff]
  %v196 = vld [vmem:[%s1 + $0x4f0] sm:$0xff]
  %v197 = vld [vmem:[%s1 + $0x4f8] sm:$0xff]
  %v198 = vld [vmem:[%s1 + $0x500] sm:$0xff]
  %v199 = vld [vmem:[%s1 + $0x508] sm:$0xff]
  %v200 = vld [vmem:[%s1 + $0x510] sm:$0xff]
  %v201 = vld [vmem:[%s1 + $0x518] sm:$0xff]
  %v202 = vld [vmem:[%s1 + $0x520] sm:$0xff]
  %v203 = vld [vmem:[%s1 + $0x528] sm:$0xff]
  %v204 = vld [vmem:[%s1 + $0x530] sm:$0xff]
  %v205 = vld [vmem:[%s1 + $0x538] sm:$0xff]
  %v206 = vld [vmem:[%s1 + $0x540] sm:$0xff]
  %v207 = vld [vmem:[%s1 + $0x548] sm:$0xff]
  %v208 = vld [vmem:[%s1 + $0x550] sm:$0xff]
  %v209 = vld [vmem:[%s1 + $0x558] sm:$0xff]
  %v210 = vld [vmem:[%s1 + $0x560] sm:$0xff]
  %v211 = vld [vmem:[%s1 + $0x568] sm:$0xff]
  %v212 = vld [vmem:[%s1 + $0x570] sm:$0xff]
  %v213 = vld [vmem:[%s1 + $0x578] sm:$0xff]
  %v214 = vld [vmem:[%s1 + $0x580] sm:$0xff]
  %v215 = vld [vmem:[%s1 + $0x588] sm:$0xff]
  %v216 = vld [vmem:[%s1 + $0x590] sm:$0xff]
  %v217 = vld [vmem:[%s1 + $0x598] sm:$0xff]
  %v218 = vld [vmem:[%s1 + $0x5a0] sm:$0xff]
  %v219 = vld [vmem:[%s1 + $0x5a8] sm:$0xff]
  %v220 = vld [vmem:[%s1 + $0x5b0] sm:$0xff]
  %v221 = vld [vmem:[%s1 + $0x5b8] sm:$0xff]
  %v222 = vld [vmem:[%s1 + $0x5c0] sm:$0xff]
  %v223 = vld [vmem:[%s1 + $0x5c8] sm:$0xff]
  %v224 = vld [vmem:[%s1 + $0x5d0] sm:$0xff]
  %v225 = vld [vmem:[%s1 + $0x5d8] sm:$0xff]
  %v226 = vld [vmem:[%s1 + $0x5e0] sm:$0xff]
  %v227 = vld [vmem:[%s1 + $0x5e8] sm:$0xff]
  %v228 = vld [vmem:[%s1 + $0x5f0] sm:$0xff]
  %v229 = vld [vmem:[%s1 + $0x5f8] sm:$0xff]
  %v230 = vld [vmem:[%s1 + $0x600] sm:$0xff]
  %v231 = vld [vmem:[%s1 + $0x608] sm:$0xff]
  %v232 = vld [vmem:[%s1 + $0x610] sm:$0xff]
  %v233 = vld [vmem:[%s1 + $0x618] sm:$0xff]
  %v234 = vld [vmem:[%s1 + $0x620] sm:$0xff]
  %v235 = vld [vmem:[%s1 + $0x628] sm:$0xff]
  %v236 = vld [vmem:[%s1 + $0x630] sm:$0xff]
  %v237 = vld [vmem:[%s1 + $0x638] sm:$0xff]
  %v238 = vld [vmem:[%s1 + $0x640] sm:$0xff]
  %v239 = vld [vmem:[%s1 + $0x648] sm:$0xff]
  %v240 = vld [vmem:[%s1 + $0x650] sm:$0xff]
  %v241 = vld [vmem:[%s1 + $0x658] sm:$0xff]
  %v242 = vld [vmem:[%s1 + $0x660] sm:$0xff]
  %v243 = vld [vmem:[%s1 + $0x668] sm:$0xff]
  %v244 = vld [vmem:[%s1 + $0x670] sm:$0xff]
  %v245 = vld [vmem:[%s1 + $0x678] sm:$0xff]
  %v246 = vld [vmem:[%s1 + $0x680] sm:$0xff]
  %v247 = vld [vmem:[%s1 + $0x688] sm:$0xff]
  %v248 = vld [vmem:[%s1 + $0x690] sm:$0xff]
  %v249 = vld [vmem:[%s1 + $0x698] sm:$0xff]
  %v250 = vld [vmem:[%s1 + $0x6a0] sm:$0xff]
  %v251 = vld [vmem:[%s1 + $0x6a8] sm:$0xff]
  %v252 = vld [vmem:[%s1 + $0x6b0] sm:$0xff]
  %v253 = vld [vmem:[%s1 + $0x6b8] sm:$0xff]
  %v254 = vld [vmem:[%s1 + $0x6c0] sm:$0xff]
  %v255 = vld [vmem:[%s1 + $0x6c8] sm:$0xff]
  %v256 = vld [vmem:[%s1 + $0x6d0] sm:$0xff]
  %v257 = vld [vmem:[%s1 + $0x6d8] sm:$0xff]
  %v258 = vld [vmem:[%s1 + $0x6e0] sm:$0xff]
  %v259 = vld [vmem:[%s1 + $0x6e8] sm:$0xff]
  %v260 = vld [vmem:[%s1 + $0x6f0] sm:$0xff]
  %v261 = vld [vmem:[%s1 + $0x6f8] sm:$0xff]
  %v262 = vld [vmem:[%s1 + $0x700] sm:$0xff]
  %v263 = vld [vmem:[%s1 + $0x708] sm:$0xff]
  %v264 = vld [vmem:[%s1 + $0x710] sm:$0xff]
  %v265 = vld [vmem:[%s1 + $0x718] sm:$0xff]
  %v266 = vld [vmem:[%s1 + $0x720] sm:$0xff]
  %v267 = vld [vmem:[%s1 + $0x728] sm:$0xff]
  %v268 = vld [vmem:[%s1 + $0x730] sm:$0xff]
  %v269 = vld [vmem:[%s1 + $0x738] sm:$0xff]
  %v270 = vld [vmem:[%s1 + $0x740] sm:$0xff]
  %v271 = vld [vmem:[%s1 + $0x748] sm:$0xff]
  %v272 = vld [vmem:[%s1 + $0x750] sm:$0xff]
  %v273 = vld [vmem:[%s1 + $0x758] sm:$0xff]
  %v274 = vld [vmem:[%s1 + $0x760] sm:$0xff]
  %v275 = vld [vmem:[%s1 + $0x768] sm:$0xff]
  %v276 = vld [vmem:[%s1 + $0x770] sm:$0xff]
  %v277 = vld [vmem:[%s1 + $0x778] sm:$0xff]
  %v278 = vld [vmem:[%s1 + $0x780] sm:$0xff]
  %v279 = vld [vmem:[%s1 + $0x788] sm:$0xff]
  %v280 = vld [vmem:[%s1 + $0x790] sm:$0xff]
  %v281 = vld [vmem:[%s1 + $0x798] sm:$0xff]
  %v282 = vld [vmem:[%s1 + $0x7a0] sm:$0xff]
  %v283 = vld [vmem:[%s1 + $0x7a8] sm:$0xff]
  %v284 = vld [vmem:[%s1 + $0x7b0] sm:$0xff]
  %v285 = vld [vmem:[%s1 + $0x7b8] sm:$0xff]
  %v286 = vld [vmem:[%s1 + $0x7c0] sm:$0xff]
  %v287 = vld [vmem:[%s1 + $0x7c8] sm:$0xff]
  %v288 = vld [vmem:[%s1 + $0x7d0] sm:$0xff]
  %v289 = vld [vmem:[%s1 + $0x7d8] sm:$0xff]
  %v290 = vld [vmem:[%s1 + $0x7e0] sm:$0xff]
  %v291 = vld [vmem:[%s1 + $0x7e8] sm:$0xff]
  %v292 = vld [vmem:[%s1 + $0x7f0] sm:$0xff]
  %v293 = vld [vmem:[%s1 + $0x7f8] sm:$0xff]
  %v294 = vld [vmem:[%s1 + $0x800] sm:$0xff]
  %v295 = vld [vmem:[%s1 + $0x808] sm:$0xff]
  %v296 = vld [vmem:[%s1 + $0x810] sm:$0xff]
  %v297 = vld [vmem:[%s1 + $0x818] sm:$0xff]
  %v298 = vld [vmem:[%s1 + $0x820] sm:$0xff]
  %v299 = vld [vmem:[%s1 + $0x828] sm:$0xff]
  %v300 = vld [vmem:[%s1 + $0x830] sm:$0xff]
  %v301 = vld [vmem:[%s1 + $0x838] sm:$0xff]
  %v302 = vld [vmem:[%s1 + $0x840] sm:$0xff]
  %v303 = vld [vmem:[%s1 + $0x848] sm:$0xff]
  %v304 = vld [vmem:[%s1 + $0x850] sm:$0xff]
  %v305 = vld [vmem:[%s1 + $0x858] sm:$0xff]
  %v306 = vld [vmem:[%s1 + $0x860] sm:$0xff]
  %v307 = vld [vmem:[%s1 + $0x868] sm:$0xff]
  %v308 = vld [vmem:[%s1 + $0x870] sm:$0xff]
  %v309 = vld [vmem:[%s1 + $0x878] sm:$0xff]
  %v310 = vld [vmem:[%s1 + $0x880] sm:$0xff]
  %v311 = vld [vmem:[%s1 + $0x888] sm:$0xff]
  %v312 = vld [vmem:[%s1 + $0x890] sm:$0xff]
  %v313 = vld [vmem:[%s1 + $0x898] sm:$0xff]
  %v314 = vld [vmem:[%s1 + $0x8a0] sm:$0xff]
  %v315 = vld [vmem:[%s1 + $0x8a8] sm:$0xff]
  %v316 = vld [vmem:[%s1 + $0x8b0] sm:$0xff]
  %v317 = vld [vmem:[%s1 + $0x8b8] sm:$0xff]
  %v318 = vld [vmem:[%s1 + $0x8c0] sm:$0xff]
  %v319 = vld [vmem:[%s1 + $0x8c8] sm:$0xff]
  %v320 = vld [vmem:[%s1 + $0x8d0] sm:$0xff]
  %v321 = vld [vmem:[%s1 + $0x8d8] sm:$0xff]
  %v322 = vld [vmem:[%s1 + $0x8e0] sm:$0xff]
  %v323 = vld [vmem:[%s1 + $0x8e8] sm:$0xff]
  %v324 = vld [vmem:[%s1 + $0x8f0] sm:$0xff]
  %v325 = vld [vmem:[%s1 + $0x8f8] sm:$0xff]
  %v326 = vld [vmem:[%s1 + $0x900] sm:$0xff]
  %v327 = vld [vmem:[%s1 + $0x908] sm:$0xff]
  %v328 = vld [vmem:[%s1 + $0x910] sm:$0xff]
  %v329 = vld [vmem:[%s1 + $0x918] sm:$0xff]
  %v330 = vld [vmem:[%s1 + $0x920] sm:$0xff]
  %v331 = vld [vmem:[%s1 + $0x928] sm:$0xff]
  %v332 = vld [vmem:[%s1 + $0x930] sm:$0xff]
  %v333 = vld [vmem:[%s1 + $0x938] sm:$0xff]
  %v334 = vld [vmem:[%s1 + $0x940] sm:$0xff]
  %v335 = vld [vmem:[%s1 + $0x948] sm:$0xff]
  %v336 = vld [vmem:[%s1 + $0x950] sm:$0xff]
  %v337 = vld [vmem:[%s1 + $0x958] sm:$0xff]
  %v338 = vld [vmem:[%s1 + $0x960] sm:$0xff]
  %v339 = vld [vmem:[%s1 + $0x968] sm:$0xff]
  %v340 = vld [vmem:[%s1 + $0x970] sm:$0xff]
  %v341 = vld [vmem:[%s1 + $0x978] sm:$0xff]
  %v342 = vld [vmem:[%s1 + $0x980] sm:$0xff]
  %v343 = vld [vmem:[%s1 + $0x988] sm:$0xff]
  %v344 = vld [vmem:[%s1 + $0x990] sm:$0xff]
  %v345 = vld [vmem:[%s1 + $0x998] sm:$0xff]
  %v346 = vld [vmem:[%s1 + $0x9a0] sm:$0xff]
  %v347 = vld [vmem:[%s1 + $0x9a8] sm:$0xff]
  %v348 = vld [vmem:[%s1 + $0x9b0] sm:$0xff]
  %v349 = vld [vmem:[%s1 + $0x9b8] sm:$0xff]
  %v350 = vld [vmem:[%s1 + $0x9c0] sm:$0xff]
  %v351 = vld [vmem:[%s1 + $0x9c8] sm:$0xff]
  %v352 = vld [vmem:[%s1 + $0x9d0] sm:$0xff]
  %v353 = vld [vmem:[%s1 + $0x9d8] sm:$0xff]
  %v354 = vld [vmem:[%s1 + $0x9e0] sm:$0xff]
  %v355 = vld [vmem:[%s1 + $0x9e8] sm:$0xff]
  %v356 = vld [vmem:[%s1 + $0x9f0] sm:$0xff]
  %v357 = vld [vmem:[%s1 + $0x9f8] sm:$0xff]
  %v358 = vld [vmem:[%s1 + $0xa00] sm:$0xff]
  %v359 = vld [vmem:[%s1 + $0xa08] sm:$0xff]
  %v360 = vld [vmem:[%s1 + $0xa10] sm:$0xff]
  %v361 = vld [vmem:[%s1 + $0xa18] sm:$0xff]
  %v362 = vld [vmem:[%s1 + $0xa20] sm:$0xff]
  %v363 = vld [vmem:[%s1 + $0xa28] sm:$0xff]
  %v364 = vld [vmem:[%s1 + $0xa30] sm:$0xff]
  %v365 = vld [vmem:[%s1 + $0xa38] sm:$0xff]
  %v366 = vld [vmem:[%s1 + $0xa40] sm:$0xff]
  %v367 = vld [vmem:[%s1 + $0xa48] sm:$0xff]
  %v368 = vld [vmem:[%s1 + $0xa50] sm:$0xff]
  %v369 = vld [vmem:[%s1 + $0xa58] sm:$0xff]
  %v370 = vld [vmem:[%s1 + $0xa60] sm:$0xff]
  %v371 = vld [vmem:[%s1 + $0xa68] sm:$0xff]
  %v372 = vld [vmem:[%s1 + $0xa70] sm:$0xff]
  %v373 = vld [vmem:[%s1 + $0xa78] sm:$0xff]
  %374 = vmatprep.subr.mxu0 %v84
  %375 = vmatpush1.msra.mxu0 %v83
  %376 = vmatprep.subr.mxu0 %v81
  %377 = vmatpush1.msra.mxu0 %v80
  %378 = vmatprep.subr.mxu0 %v78
  %379 = vmatpush1.msra.mxu0 %v77
  %380 = vmatprep.subr.mxu0 %v75
  %381 = vmatpush1.msra.mxu0 %v74
  %382 = vmatprep.subr.mxu0 %v72
  %383 = vmatpush1.msra.mxu0 %v71
  %384 = vmatprep.subr.mxu0 %v69
  %385 = vmatpush1.msra.mxu0 %v68
  %386 = vmatprep.subr.mxu0 %v66
  %387 = vmatpush1.msra.mxu0 %v65
  %388 = vmatprep.subr.mxu0 %v63
  %389 = vmatpush1.msra.mxu0 %v62
  %390 = vmatprep.subr.mxu0 %v60
  %391 = vmatpush1.msra.mxu0 %v59
  %392 = vmatprep.subr.mxu0 %v57
  %393 = vmatpush1.msra.mxu0 %v56
  %394 = vmatprep.subr.mxu0 %v54
  %395 = vmatpush1.msra.mxu0 %v53
  %396 = vmatprep.subr.mxu0 %v51
  %397 = vmatpush1.msra.mxu0 %v50
  %398 = vmatprep.subr.mxu0 %v48
  %399 = vmatpush1.msra.mxu0 %v47
  %400 = vmatprep.subr.mxu0 %v45
  %401 = vmatpush1.msra.mxu0 %v44
  %402 = vmatprep.subr.mxu0 %v42
  %403 = vmatpush1.msra.mxu0 %v41
  %404 = vmatprep.subr.mxu0 %v39
  %405 = vmatpush1.msra.mxu0 %v38
  %406 = vmatprep.subr.mxu0 %v132
  %407 = vmatpush2.msra.mxu0 %v131
  %408 = vmatprep.subr.mxu0 %v129
  %409 = vmatpush2.msra.mxu0 %v128
  %410 = vmatprep.subr.mxu0 %v126
  %411 = vmatpush2.msra.mxu0 %v125
  %412 = vmatprep.subr.mxu0 %v123
  %413 = vmatpush2.msra.mxu0 %v122
  %414 = vmatprep.subr.mxu0 %v120
  %415 = vmatpush2.msra.mxu0 %v119
  %416 = vmatprep.subr.mxu0 %v117
  %417 = vmatpush2.msra.mxu0 %v116
  %418 = vmatprep.subr.mxu0 %v114
  %419 = vmatpush2.msra.mxu0 %v113
  %420 = vmatprep.subr.mxu0 %v111
  %421 = vmatpush2.msra.mxu0 %v110
  %422 = vmatprep.subr.mxu0 %v108
  %423 = vmatpush2.msra.mxu0 %v107
  %424 = vmatprep.subr.mxu0 %v105
  %425 = vmatpush2.msra.mxu0 %v104
  %426 = vmatprep.subr.mxu0 %v102
  %427 = vmatpush2.msra.mxu0 %v101
  %428 = vmatprep.subr.mxu0 %v99
  %429 = vmatpush2.msra.mxu0 %v98
  %430 = vmatprep.subr.mxu0 %v96
  %431 = vmatpush2.msra.mxu0 %v95
  %432 = vmatprep.subr.mxu0 %v93
  %433 = vmatpush2.msra.mxu0 %v92
  %434 = vmatprep.subr.mxu0 %v90
  %435 = vmatpush2.msra.mxu0 %v89
  %436 = vmatprep.subr.mxu0 %v87
  %437 = vmatpush2.msra.mxu0 %v86
  %438 = vmatprep.mubr.f32.mxu0 %v32
  %439 = vmatmul.mubr.f32.gmra.mxu0 %v31
  %v440 = vpop.f32.mrf.mxu0
  %v441 = vadd.f32 0.0, %v440
  %v442 = vpop.f32.mrf.mxu0
  %v443 = vadd.f32 0.0, %v442
  %444 = vdwg.mxu0
  %445 = vmatprep.subr.mxu0 %v180
  %446 = vmatpush1.msra.mxu0 %v179
  %447 = vmatprep.subr.mxu0 %v177
  %448 = vmatpush1.msra.mxu0 %v176
  %449 = vmatprep.subr.mxu0 %v174
  %450 = vmatpush1.msra.mxu0 %v173
  %451 = vmatprep.subr.mxu0 %v171
  %452 = vmatpush1.msra.mxu0 %v170
  %453 = vmatprep.subr.mxu0 %v168
  %454 = vmatpush1.msra.mxu0 %v167
  %455 = vmatprep.subr.mxu0 %v165
  %456 = vmatpush1.msra.mxu0 %v164
  %457 = vmatprep.subr.mxu0 %v162
  %458 = vmatpush1.msra.mxu0 %v161
  %459 = vmatprep.subr.mxu0 %v159
  %460 = vmatpush1.msra.mxu0 %v158
  %461 = vmatprep.subr.mxu0 %v156
  %462 = vmatpush1.msra.mxu0 %v155
  %463 = vmatprep.subr.mxu0 %v153
  %464 = vmatpush1.msra.mxu0 %v152
  %465 = vmatprep.subr.mxu0 %v150
  %466 = vmatpush1.msra.mxu0 %v149
  %467 = vmatprep.subr.mxu0 %v147
  %468 = vmatpush1.msra.mxu0 %v146
  %469 = vmatprep.subr.mxu0 %v144
  %470 = vmatpush1.msra.mxu0 %v143
  %471 = vmatprep.subr.mxu0 %v141
  %472 = vmatpush1.msra.mxu0 %v140
  %473 = vmatprep.subr.mxu0 %v138
  %474 = vmatpush1.msra.mxu0 %v137
  %475 = vmatprep.subr.mxu0 %v135
  %476 = vmatpush1.msra.mxu0 %v134
  %477 = vmatprep.subr.mxu0 %v228
  %478 = vmatpush2.msra.mxu0 %v227
  %479 = vmatprep.subr.mxu0 %v225
  %480 = vmatpush2.msra.mxu0 %v224
  %481 = vmatprep.subr.mxu0 %v222
  %482 = vmatpush2.msra.mxu0 %v221
  %483 = vmatprep.subr.mxu0 %v219
  %484 = vmatpush2.msra.mxu0 %v218
  %485 = vmatprep.subr.mxu0 %v216
  %486 = vmatpush2.msra.mxu0 %v215
  %487 = vmatprep.subr.mxu0 %v213
  %488 = vmatpush2.msra.mxu0 %v212
  %489 = vmatprep.subr.mxu0 %v210
  %490 = vmatpush2.msra.mxu0 %v209
  %491 = vmatprep.subr.mxu0 %v207
  %492 = vmatpush2.msra.mxu0 %v206
  %493 = vmatprep.subr.mxu0 %v204
  %494 = vmatpush2.msra.mxu0 %v203
  %495 = vmatprep.subr.mxu0 %v201
  %496 = vmatpush2.msra.mxu0 %v200
  %497 = vmatprep.subr.mxu0 %v198
  %498 = vmatpush2.msra.mxu0 %v197
  %499 = vmatprep.subr.mxu0 %v195
  %500 = vmatpush2.msra.mxu0 %v194
  %501 = vmatprep.subr.mxu0 %v192
  %502 = vmatpush2.msra.mxu0 %v191
  %503 = vmatprep.subr.mxu0 %v189
  %504 = vmatpush2.msra.mxu0 %v188
  %505 = vmatprep.subr.mxu0 %v186
  %506 = vmatpush2.msra.mxu0 %v185
  %507 = vmatprep.subr.mxu0 %v183
  %508 = vmatpush2.msra.mxu0 %v182
  %509 = vmatprep.mubr.f32.mxu0 %v34
  %510 = vmatmul.mubr.f32.gmra.mxu0 %v33
  %v511 = vpop.f32.mrf.mxu0
  %v512 = vadd.f32 %v441, %v511
  %v513 = vpop.f32.mrf.mxu0
  %v514 = vadd.f32 %v443, %v513
  %515 = vdwg.mxu0
  %516 = vmatprep.subr.mxu0 %v276
  %517 = vmatpush1.msra.mxu0 %v275
  %518 = vmatprep.subr.mxu0 %v273
  %519 = vmatpush1.msra.mxu0 %v272
  %520 = vmatprep.subr.mxu0 %v270
  %521 = vmatpush1.msra.mxu0 %v269
  %522 = vmatprep.subr.mxu0 %v267
  %523 = vmatpush1.msra.mxu0 %v266
  %524 = vmatprep.subr.mxu0 %v264
  %525 = vmatpush1.msra.mxu0 %v263
  %526 = vmatprep.subr.mxu0 %v261
  %527 = vmatpush1.msra.mxu0 %v260
  %528 = vmatprep.subr.mxu0 %v258
  %529 = vmatpush1.msra.mxu0 %v257
  %530 = vmatprep.subr.mxu0 %v255
  %531 = vmatpush1.msra.mxu0 %v254
  %532 = vmatprep.subr.mxu0 %v252
  %533 = vmatpush1.msra.mxu0 %v251
  %534 = vmatprep.subr.mxu0 %v249
  %535 = vmatpush1.msra.mxu0 %v248
  %536 = vmatprep.subr.mxu0 %v246
  %537 = vmatpush1.msra.mxu0 %v245
  %538 = vmatprep.subr.mxu0 %v243
  %539 = vmatpush1.msra.mxu0 %v242
  %540 = vmatprep.subr.mxu0 %v240
  %541 = vmatpush1.msra.mxu0 %v239
  %542 = vmatprep.subr.mxu0 %v237
  %543 = vmatpush1.msra.mxu0 %v236
  %544 = vmatprep.subr.mxu0 %v234
  %545 = vmatpush1.msra.mxu0 %v233
  %546 = vmatprep.subr.mxu0 %v231
  %547 = vmatpush1.msra.mxu0 %v230
  %548 = vmatprep.subr.mxu0 %v324
  %549 = vmatpush2.msra.mxu0 %v323
  %550 = vmatprep.subr.mxu0 %v321
  %551 = vmatpush2.msra.mxu0 %v320
  %552 = vmatprep.subr.mxu0 %v318
  %553 = vmatpush2.msra.mxu0 %v317
  %554 = vmatprep.subr.mxu0 %v315
  %555 = vmatpush2.msra.mxu0 %v314
  %556 = vmatprep.subr.mxu0 %v312
  %557 = vmatpush2.msra.mxu0 %v311
  %558 = vmatprep.subr.mxu0 %v309
  %559 = vmatpush2.msra.mxu0 %v308
  %560 = vmatprep.subr.mxu0 %v306
  %561 = vmatpush2.msra.mxu0 %v305
  %562 = vmatprep.subr.mxu0 %v303
  %563 = vmatpush2.msra.mxu0 %v302
  %564 = vmatprep.subr.mxu0 %v300
  %565 = vmatpush2.msra.mxu0 %v299
  %566 = vmatprep.subr.mxu0 %v297
  %567 = vmatpush2.msra.mxu0 %v296
  %568 = vmatprep.subr.mxu0 %v294
  %569 = vmatpush2.msra.mxu0 %v293
  %570 = vmatprep.subr.mxu0 %v291
  %571 = vmatpush2.msra.mxu0 %v290
  %572 = vmatprep.subr.mxu0 %v288
  %573 = vmatpush2.msra.mxu0 %v287
  %574 = vmatprep.subr.mxu0 %v285
  %575 = vmatpush2.msra.mxu0 %v284
  %576 = vmatprep.subr.mxu0 %v282
  %577 = vmatpush2.msra.mxu0 %v281
  %578 = vmatprep.subr.mxu0 %v279
  %579 = vmatpush2.msra.mxu0 %v278
  %580 = vmatprep.mubr.f32.mxu0 %v36
  %581 = vmatmul.mubr.f32.gmra.mxu0 %v35
  %v582 = vpop.f32.mrf.mxu0
  %v583 = vadd.f32 %v512, %v582
  %v584 = vpop.f32.mrf.mxu0
  %v585 = vadd.f32 %v514, %v584
  %586 = vdwg.mxu0
  %587 = vmatprep.subr.mxu0 %v372
  %588 = vmatpush1.msra.mxu0 %v371
  %589 = vmatprep.subr.mxu0 %v369
  %590 = vmatpush1.msra.mxu0 %v368
  %591 = vmatprep.subr.mxu0 %v366
  %592 = vmatpush1.msra.mxu0 %v365
  %593 = vmatprep.subr.mxu0 %v363
  %594 = vmatpush1.msra.mxu0 %v362
  %595 = vmatprep.subr.mxu0 %v360
  %596 = vmatpush1.msra.mxu0 %v359
  %597 = vmatprep.subr.mxu0 %v357
  %598 = vmatpush1.msra.mxu0 %v356
  %599 = vmatprep.subr.mxu0 %v354
  %600 = vmatpush1.msra.mxu0 %v353
  %601 = vmatprep.subr.mxu0 %v351
  %602 = vmatpush1.msra.mxu0 %v350
  %603 = vmatprep.subr.mxu0 %v348
  %604 = vmatpush1.msra.mxu0 %v347
  %605 = vmatprep.subr.mxu0 %v345
  %606 = vmatpush1.msra.mxu0 %v344
  %607 = vmatprep.subr.mxu0 %v342
  %608 = vmatpush1.msra.mxu0 %v341
  %609 = vmatprep.subr.mxu0 %v339
  %610 = vmatpush1.msra.mxu0 %v338
  %611 = vmatprep.subr.mxu0 %v336
  %612 = vmatpush1.msra.mxu0 %v335
  %613 = vmatprep.subr.mxu0 %v333
  %614 = vmatpush1.msra.mxu0 %v332
  %615 = vmatprep.subr.mxu0 %v330
  %616 = vmatpush1.msra.mxu0 %v329
  %617 = vmatprep.subr.mxu0 %v327
  %618 = vmatpush1.msra.mxu0 %v326
  %619 = vmatprep.subr.mxu0 0.0
  %620 = vmatpush2.msra.mxu0 0.0
  %621 = vmatprep.subr.mxu0 0.0
  %622 = vmatpush2.msra.mxu0 0.0
  %623 = vmatprep.subr.mxu0 0.0
  %624 = vmatpush2.msra.mxu0 0.0
  %625 = vmatprep.subr.mxu0 0.0
  %626 = vmatpush2.msra.mxu0 0.0
  %627 = vmatprep.subr.mxu0 0.0
  %628 = vmatpush2.msra.mxu0 0.0
  %629 = vmatprep.subr.mxu0 0.0
  %630 = vmatpush2.msra.mxu0 0.0
  %631 = vmatprep.subr.mxu0 0.0
  %632 = vmatpush2.msra.mxu0 0.0
  %633 = vmatprep.subr.mxu0 0.0
  %634 = vmatpush2.msra.mxu0 0.0
  %635 = vmatprep.subr.mxu0 0.0
  %636 = vmatpush2.msra.mxu0 0.0
  %637 = vmatprep.subr.mxu0 0.0
  %638 = vmatpush2.msra.mxu0 0.0
  %639 = vmatprep.subr.mxu0 0.0
  %640 = vmatpush2.msra.mxu0 0.0
  %641 = vmatprep.subr.mxu0 0.0
  %642 = vmatpush2.msra.mxu0 0.0
  %643 = vmatprep.subr.mxu0 0.0
  %644 = vmatpush2.msra.mxu0 0.0
  %645 = vmatprep.subr.mxu0 0.0
  %646 = vmatpush2.msra.mxu0 0.0
  %647 = vmatprep.subr.mxu0 0.0
  %648 = vmatpush2.msra.mxu0 0.0
  %649 = vmatprep.subr.mxu0 0.0
  %650 = vmatpush2.msra.mxu0 0.0
  %651 = vmatprep.mubr.f32.mxu0 0.0
  %652 = vmatmul.mubr.f32.gmra.mxu0 %v37
  %v653 = vpop.f32.mrf.mxu0
  %v654 = vadd.f32 %v583, %v653
  %v655 = vpop.f32.mrf.mxu0
  %v656 = vadd.f32 %v585, %v655
  %657 = vdwg.mxu0
  %658 = vmatprep.subr.mxu0 0.0
  %659 = vmatpush1.msra.mxu0 %v85
  %660 = vmatprep.subr.mxu0 0.0
  %661 = vmatpush1.msra.mxu0 %v82
  %662 = vmatprep.subr.mxu0 0.0
  %663 = vmatpush1.msra.mxu0 %v79
  %664 = vmatprep.subr.mxu0 0.0
  %665 = vmatpush1.msra.mxu0 %v76
  %666 = vmatprep.subr.mxu0 0.0
  %667 = vmatpush1.msra.mxu0 %v73
  %668 = vmatprep.subr.mxu0 0.0
  %669 = vmatpush1.msra.mxu0 %v70
  %670 = vmatprep.subr.mxu0 0.0
  %671 = vmatpush1.msra.mxu0 %v67
  %672 = vmatprep.subr.mxu0 0.0
  %673 = vmatpush1.msra.mxu0 %v64
  %674 = vmatprep.subr.mxu0 0.0
  %675 = vmatpush1.msra.mxu0 %v61
  %676 = vmatprep.subr.mxu0 0.0
  %677 = vmatpush1.msra.mxu0 %v58
  %678 = vmatprep.subr.mxu0 0.0
  %679 = vmatpush1.msra.mxu0 %v55
  %680 = vmatprep.subr.mxu0 0.0
  %681 = vmatpush1.msra.mxu0 %v52
  %682 = vmatprep.subr.mxu0 0.0
  %683 = vmatpush1.msra.mxu0 %v49
  %684 = vmatprep.subr.mxu0 0.0
  %685 = vmatpush1.msra.mxu0 %v46
  %686 = vmatprep.subr.mxu0 0.0
  %687 = vmatpush1.msra.mxu0 %v43
  %688 = vmatprep.subr.mxu0 0.0
  %689 = vmatpush1.msra.mxu0 %v40
  %690 = vmatprep.subr.mxu0 0.0
  %691 = vmatpush2.msra.mxu0 %v133
  %692 = vmatprep.subr.mxu0 0.0
  %693 = vmatpush2.msra.mxu0 %v130
  %694 = vmatprep.subr.mxu0 0.0
  %695 = vmatpush2.msra.mxu0 %v127
  %696 = vmatprep.subr.mxu0 0.0
  %697 = vmatpush2.msra.mxu0 %v124
  %698 = vmatprep.subr.mxu0 0.0
  %699 = vmatpush2.msra.mxu0 %v121
  %700 = vmatprep.subr.mxu0 0.0
  %701 = vmatpush2.msra.mxu0 %v118
  %702 = vmatprep.subr.mxu0 0.0
  %703 = vmatpush2.msra.mxu0 %v115
  %704 = vmatprep.subr.mxu0 0.0
  %705 = vmatpush2.msra.mxu0 %v112
  %706 = vmatprep.subr.mxu0 0.0
  %707 = vmatpush2.msra.mxu0 %v109
  %708 = vmatprep.subr.mxu0 0.0
  %709 = vmatpush2.msra.mxu0 %v106
  %710 = vmatprep.subr.mxu0 0.0
  %711 = vmatpush2.msra.mxu0 %v103
  %712 = vmatprep.subr.mxu0 0.0
  %713 = vmatpush2.msra.mxu0 %v100
  %714 = vmatprep.subr.mxu0 0.0
  %715 = vmatpush2.msra.mxu0 %v97
  %716 = vmatprep.subr.mxu0 0.0
  %717 = vmatpush2.msra.mxu0 %v94
  %718 = vmatprep.subr.mxu0 0.0
  %719 = vmatpush2.msra.mxu0 %v91
  %720 = vmatprep.subr.mxu0 0.0
  %721 = vmatpush2.msra.mxu0 %v88
  %722 = vmatprep.mubr.f32.mxu0 %v32
  %723 = vmatmul.mubr.f32.gmra.mxu0 %v31
  %v724 = vpop.f32.mrf.mxu0
  %v725 = vadd.f32 0.0, %v724
  %v726 = vpop.f32.mrf.mxu0
  %727 = vdwg.mxu0
  %728 = vmatprep.subr.mxu0 0.0
  %729 = vmatpush1.msra.mxu0 %v181
  %730 = vmatprep.subr.mxu0 0.0
  %731 = vmatpush1.msra.mxu0 %v178
  %732 = vmatprep.subr.mxu0 0.0
  %733 = vmatpush1.msra.mxu0 %v175
  %734 = vmatprep.subr.mxu0 0.0
  %735 = vmatpush1.msra.mxu0 %v172
  %736 = vmatprep.subr.mxu0 0.0
  %737 = vmatpush1.msra.mxu0 %v169
  %738 = vmatprep.subr.mxu0 0.0
  %739 = vmatpush1.msra.mxu0 %v166
  %740 = vmatprep.subr.mxu0 0.0
  %741 = vmatpush1.msra.mxu0 %v163
  %742 = vmatprep.subr.mxu0 0.0
  %743 = vmatpush1.msra.mxu0 %v160
  %744 = vmatprep.subr.mxu0 0.0
  %745 = vmatpush1.msra.mxu0 %v157
  %746 = vmatprep.subr.mxu0 0.0
  %747 = vmatpush1.msra.mxu0 %v154
  %748 = vmatprep.subr.mxu0 0.0
  %749 = vmatpush1.msra.mxu0 %v151
  %750 = vmatprep.subr.mxu0 0.0
  %751 = vmatpush1.msra.mxu0 %v148
  %752 = vmatprep.subr.mxu0 0.0
  %753 = vmatpush1.msra.mxu0 %v145
  %754 = vmatprep.subr.mxu0 0.0
  %755 = vmatpush1.msra.mxu0 %v142
  %756 = vmatprep.subr.mxu0 0.0
  %757 = vmatpush1.msra.mxu0 %v139
  %758 = vmatprep.subr.mxu0 0.0
  %759 = vmatpush1.msra.mxu0 %v136
  %760 = vmatprep.subr.mxu0 0.0
  %761 = vmatpush2.msra.mxu0 %v229
  %762 = vmatprep.subr.mxu0 0.0
  %763 = vmatpush2.msra.mxu0 %v226
  %764 = vmatprep.subr.mxu0 0.0
  %765 = vmatpush2.msra.mxu0 %v223
  %766 = vmatprep.subr.mxu0 0.0
  %767 = vmatpush2.msra.mxu0 %v220
  %768 = vmatprep.subr.mxu0 0.0
  %769 = vmatpush2.msra.mxu0 %v217
  %770 = vmatprep.subr.mxu0 0.0
  %771 = vmatpush2.msra.mxu0 %v214
  %772 = vmatprep.subr.mxu0 0.0
  %773 = vmatpush2.msra.mxu0 %v211
  %774 = vmatprep.subr.mxu0 0.0
  %775 = vmatpush2.msra.mxu0 %v208
  %776 = vmatprep.subr.mxu0 0.0
  %777 = vmatpush2.msra.mxu0 %v205
  %778 = vmatprep.subr.mxu0 0.0
  %779 = vmatpush2.msra.mxu0 %v202
  %780 = vmatprep.subr.mxu0 0.0
  %781 = vmatpush2.msra.mxu0 %v199
  %782 = vmatprep.subr.mxu0 0.0
  %783 = vmatpush2.msra.mxu0 %v196
  %784 = vmatprep.subr.mxu0 0.0
  %785 = vmatpush2.msra.mxu0 %v193
  %786 = vmatprep.subr.mxu0 0.0
  %787 = vmatpush2.msra.mxu0 %v190
  %788 = vmatprep.subr.mxu0 0.0
  %789 = vmatpush2.msra.mxu0 %v187
  %790 = vmatprep.subr.mxu0 0.0
  %791 = vmatpush2.msra.mxu0 %v184
  %792 = vmatprep.mubr.f32.mxu0 %v34
  %793 = vmatmul.mubr.f32.gmra.mxu0 %v33
  %v794 = vpop.f32.mrf.mxu0
  %v795 = vadd.f32 %v725, %v794
  %v796 = vpop.f32.mrf.mxu0
  %797 = vdwg.mxu0
  %798 = vmatprep.subr.mxu0 0.0
  %799 = vmatpush1.msra.mxu0 %v277
  %800 = vmatprep.subr.mxu0 0.0
  %801 = vmatpush1.msra.mxu0 %v274
  %802 = vmatprep.subr.mxu0 0.0
  %803 = vmatpush1.msra.mxu0 %v271
  %804 = vmatprep.subr.mxu0 0.0
  %805 = vmatpush1.msra.mxu0 %v268
  %806 = vmatprep.subr.mxu0 0.0
  %807 = vmatpush1.msra.mxu0 %v265
  %808 = vmatprep.subr.mxu0 0.0
  %809 = vmatpush1.msra.mxu0 %v262
  %810 = vmatprep.subr.mxu0 0.0
  %811 = vmatpush1.msra.mxu0 %v259
  %812 = vmatprep.subr.mxu0 0.0
  %813 = vmatpush1.msra.mxu0 %v256
  %814 = vmatprep.subr.mxu0 0.0
  %815 = vmatpush1.msra.mxu0 %v253
  %816 = vmatprep.subr.mxu0 0.0
  %817 = vmatpush1.msra.mxu0 %v250
  %818 = vmatprep.subr.mxu0 0.0
  %819 = vmatpush1.msra.mxu0 %v247
  %820 = vmatprep.subr.mxu0 0.0
  %821 = vmatpush1.msra.mxu0 %v244
  %822 = vmatprep.subr.mxu0 0.0
  %823 = vmatpush1.msra.mxu0 %v241
  %824 = vmatprep.subr.mxu0 0.0
  %825 = vmatpush1.msra.mxu0 %v238
  %826 = vmatprep.subr.mxu0 0.0
  %827 = vmatpush1.msra.mxu0 %v235
  %828 = vmatprep.subr.mxu0 0.0
  %829 = vmatpush1.msra.mxu0 %v232
  %830 = vmatprep.subr.mxu0 0.0
  %831 = vmatpush2.msra.mxu0 %v325
  %832 = vmatprep.subr.mxu0 0.0
  %833 = vmatpush2.msra.mxu0 %v322
  %834 = vmatprep.subr.mxu0 0.0
  %835 = vmatpush2.msra.mxu0 %v319
  %836 = vmatprep.subr.mxu0 0.0
  %837 = vmatpush2.msra.mxu0 %v316
  %838 = vmatprep.subr.mxu0 0.0
  %839 = vmatpush2.msra.mxu0 %v313
  %840 = vmatprep.subr.mxu0 0.0
  %841 = vmatpush2.msra.mxu0 %v310
  %842 = vmatprep.subr.mxu0 0.0
  %843 = vmatpush2.msra.mxu0 %v307
  %844 = vmatprep.subr.mxu0 0.0
  %845 = vmatpush2.msra.mxu0 %v304
  %846 = vmatprep.subr.mxu0 0.0
  %847 = vmatpush2.msra.mxu0 %v301
  %848 = vmatprep.subr.mxu0 0.0
  %849 = vmatpush2.msra.mxu0 %v298
  %850 = vmatprep.subr.mxu0 0.0
  %851 = vmatpush2.msra.mxu0 %v295
  %852 = vmatprep.subr.mxu0 0.0
  %853 = vmatpush2.msra.mxu0 %v292
  %854 = vmatprep.subr.mxu0 0.0
  %855 = vmatpush2.msra.mxu0 %v289
  %856 = vmatprep.subr.mxu0 0.0
  %857 = vmatpush2.msra.mxu0 %v286
  %858 = vmatprep.subr.mxu0 0.0
  %859 = vmatpush2.msra.mxu0 %v283
  %860 = vmatprep.subr.mxu0 0.0
  %861 = vmatpush2.msra.mxu0 %v280
  %862 = vmatprep.mubr.f32.mxu0 %v36
  %863 = vmatmul.mubr.f32.gmra.mxu0 %v35
  %v864 = vpop.f32.mrf.mxu0
  %v865 = vadd.f32 %v795, %v864
  %v866 = vpop.f32.mrf.mxu0
  %867 = vdwg.mxu0
  %868 = vmatprep.subr.mxu0 0.0
  %869 = vmatpush1.msra.mxu0 %v373
  %870 = vmatprep.subr.mxu0 0.0
  %871 = vmatpush1.msra.mxu0 %v370
  %872 = vmatprep.subr.mxu0 0.0
  %873 = vmatpush1.msra.mxu0 %v367
  %874 = vmatprep.subr.mxu0 0.0
  %875 = vmatpush1.msra.mxu0 %v364
  %876 = vmatprep.subr.mxu0 0.0
  %877 = vmatpush1.msra.mxu0 %v361
  %878 = vmatprep.subr.mxu0 0.0
  %879 = vmatpush1.msra.mxu0 %v358
  %880 = vmatprep.subr.mxu0 0.0
  %881 = vmatpush1.msra.mxu0 %v355
  %882 = vmatprep.subr.mxu0 0.0
  %883 = vmatpush1.msra.mxu0 %v352
  %884 = vmatprep.subr.mxu0 0.0
  %885 = vmatpush1.msra.mxu0 %v349
  %886 = vmatprep.subr.mxu0 0.0
  %887 = vmatpush1.msra.mxu0 %v346
  %888 = vmatprep.subr.mxu0 0.0
  %889 = vmatpush1.msra.mxu0 %v343
  %890 = vmatprep.subr.mxu0 0.0
  %891 = vmatpush1.msra.mxu0 %v340
  %892 = vmatprep.subr.mxu0 0.0
  %893 = vmatpush1.msra.mxu0 %v337
  %894 = vmatprep.subr.mxu0 0.0
  %895 = vmatpush1.msra.mxu0 %v334
  %896 = vmatprep.subr.mxu0 0.0
  %897 = vmatpush1.msra.mxu0 %v331
  %898 = vmatprep.subr.mxu0 0.0
  %899 = vmatpush1.msra.mxu0 %v328
  %900 = vmatprep.subr.mxu0 0.0
  %901 = vmatpush2.msra.mxu0 0.0
  %902 = vmatprep.subr.mxu0 0.0
  %903 = vmatpush2.msra.mxu0 0.0
  %904 = vmatprep.subr.mxu0 0.0
  %905 = vmatpush2.msra.mxu0 0.0
  %906 = vmatprep.subr.mxu0 0.0
  %907 = vmatpush2.msra.mxu0 0.0
  %908 = vmatprep.subr.mxu0 0.0
  %909 = vmatpush2.msra.mxu0 0.0
  %910 = vmatprep.subr.mxu0 0.0
  %911 = vmatpush2.msra.mxu0 0.0
  %912 = vmatprep.subr.mxu0 0.0
  %913 = vmatpush2.msra.mxu0 0.0
  %914 = vmatprep.subr.mxu0 0.0
  %915 = vmatpush2.msra.mxu0 0.0
  %916 = vmatprep.subr.mxu0 0.0
  %917 = vmatpush2.msra.mxu0 0.0
  %918 = vmatprep.subr.mxu0 0.0
  %919 = vmatpush2.msra.mxu0 0.0
  %920 = vmatprep.subr.mxu0 0.0
  %921 = vmatpush2.msra.mxu0 0.0
  %922 = vmatprep.subr.mxu0 0.0
  %923 = vmatpush2.msra.mxu0 0.0
  %924 = vmatprep.subr.mxu0 0.0
  %925 = vmatpush2.msra.mxu0 0.0
  %926 = vmatprep.subr.mxu0 0.0
  %927 = vmatpush2.msra.mxu0 0.0
  %928 = vmatprep.subr.mxu0 0.0
  %929 = vmatpush2.msra.mxu0 0.0
  %930 = vmatprep.subr.mxu0 0.0
  %931 = vmatpush2.msra.mxu0 0.0
  %932 = vmatprep.mubr.f32.mxu0 0.0
  %933 = vmatmul.mubr.f32.gmra.mxu0 %v37
  %v934 = vpop.f32.mrf.mxu0
  %v935 = vadd.f32 %v865, %v934
  %v936 = vpop.f32.mrf.mxu0
  %937 = vdwg.mxu0
  %938 = vst [vmem:[%s7] sm:$0xff] %v654
  %939 = vst [vmem:[%s7 + $0x8] sm:$0xff] %v656
  %940 = vst [vmem:[%s7 + $0x10] sm:$0xff] %v935
  %v941 = vld [vmem:[%s2] sm:$0x7]
  %v943 = vlaneseq
  %v944 = vshrl.u32 %v943, 7
  %v945 = vsub.s32 0, %v944
  %v946 = vrot.slane %v941, %v945
  %v947 = vlaneseq
  %v948 = vshrl.u32 %v947, 7
  %v949 = vsub.s32 1, %v948
  %v950 = vrot.slane %v941, %v949
  %v951 = vlaneseq
  %v952 = vshrl.u32 %v951, 7
  %v953 = vsub.s32 2, %v952
  %v954 = vrot.slane %v941, %v953
  %v958 = vadd.f32 %v654, %v946
  %v959 = vadd.f32 %v656, %v950
  %v960 = vadd.f32 %v935, %v954
  %v961 = vmax.f32 %v958, 0.0
  %v962 = vmax.f32 %v959, 0.0
  %v963 = vmax.f32 %v960, 0.0
  %964 = vst [vmem:[%s8] sm:$0xff] %v961
  %965 = vst [vmem:[%s8 + $0x8] sm:$0xff] %v962
  %966 = vst [vmem:[%s8 + $0x10] sm:$0xff] %v963
  %v967 = vld [vmem:[%s3] sm:$0xff]
  %v968 = vld [vmem:[%s3 + $0x8] sm:$0xff]
  %v969 = vld [vmem:[%s3 + $0x10] sm:$0xff]
  %v970 = vld [vmem:[%s3 + $0x18] sm:$0xff]
  %v971 = vld [vmem:[%s3 + $0x20] sm:$0xff]
  %v972 = vld [vmem:[%s3 + $0x28] sm:$0xff]
  %v973 = vld [vmem:[%s3 + $0x30] sm:$0xff]
  %v974 = vld [vmem:[%s3 + $0x38] sm:$0xff]
  %v975 = vld [vmem:[%s3 + $0x40] sm:$0xff]
  %v976 = vld [vmem:[%s3 + $0x48] sm:$0xff]
  %v977 = vld [vmem:[%s3 + $0x50] sm:$0xff]
  %v978 = vld [vmem:[%s3 + $0x58] sm:$0xff]
  %v979 = vld [vmem:[%s3 + $0x60] sm:$0xff]
  %v980 = vld [vmem:[%s3 + $0x68] sm:$0xff]
  %v981 = vld [vmem:[%s3 + $0x70] sm:$0xff]
  %v982 = vld [vmem:[%s3 + $0x78] sm:$0xff]
  %v983 = vld [vmem:[%s3 + $0x80] sm:$0xff]
  %v984 = vld [vmem:[%s3 + $0x88] sm:$0xff]
  %v985 = vld [vmem:[%s3 + $0x90] sm:$0xff]
  %v986 = vld [vmem:[%s3 + $0x98] sm:$0xff]
  %v987 = vld [vmem:[%s3 + $0xa0] sm:$0xff]
  %v988 = vld [vmem:[%s3 + $0xa8] sm:$0xff]
  %v989 = vld [vmem:[%s3 + $0xb0] sm:$0xff]
  %v990 = vld [vmem:[%s3 + $0xb8] sm:$0xff]
  %v991 = vld [vmem:[%s3 + $0xc0] sm:$0xff]
  %v992 = vld [vmem:[%s3 + $0xc8] sm:$0xff]
  %v993 = vld [vmem:[%s3 + $0xd0] sm:$0xff]
  %v994 = vld [vmem:[%s3 + $0xd8] sm:$0xff]
  %v995 = vld [vmem:[%s3 + $0xe0] sm:$0xff]
  %v996 = vld [vmem:[%s3 + $0xe8] sm:$0xff]
  %v997 = vld [vmem:[%s3 + $0xf0] sm:$0xff]
  %v998 = vld [vmem:[%s3 + $0xf8] sm:$0xff]
  %v999 = vld [vmem:[%s3 + $0x100] sm:$0xff]
  %v1000 = vld [vmem:[%s3 + $0x108] sm:$0xff]
  %v1001 = vld [vmem:[%s3 + $0x110] sm:$0xff]
  %v1002 = vld [vmem:[%s3 + $0x118] sm:$0xff]
  %v1003 = vld [vmem:[%s3 + $0x120] sm:$0xff]
  %v1004 = vld [vmem:[%s3 + $0x128] sm:$0xff]
  %v1005 = vld [vmem:[%s3 + $0x130] sm:$0xff]
  %v1006 = vld [vmem:[%s3 + $0x138] sm:$0xff]
  %v1007 = vld [vmem:[%s3 + $0x140] sm:$0xff]
  %v1008 = vld [vmem:[%s3 + $0x148] sm:$0xff]
  %v1009 = vld [vmem:[%s3 + $0x150] sm:$0xff]
  %v1010 = vld [vmem:[%s3 + $0x158] sm:$0xff]
  %v1011 = vld [vmem:[%s3 + $0x160] sm:$0xff]
  %v1012 = vld [vmem:[%s3 + $0x168] sm:$0xff]
  %v1013 = vld [vmem:[%s3 + $0x170] sm:$0xff]
  %v1014 = vld [vmem:[%s3 + $0x178] sm:$0xff]
  %1015 = vmatprep.subr.mxu0 0.0
  %1016 = vmatpush1.msra.mxu0 %v982
  %1017 = vmatprep.subr.mxu0 0.0
  %1018 = vmatpush1.msra.mxu0 %v981
  %1019 = vmatprep.subr.mxu0 0.0
  %1020 = vmatpush1.msra.mxu0 %v980
  %1021 = vmatprep.subr.mxu0 0.0
  %1022 = vmatpush1.msra.mxu0 %v979
  %1023 = vmatprep.subr.mxu0 0.0
  %1024 = vmatpush1.msra.mxu0 %v978
  %1025 = vmatprep.subr.mxu0 0.0
  %1026 = vmatpush1.msra.mxu0 %v977
  %1027 = vmatprep.subr.mxu0 0.0
  %1028 = vmatpush1.msra.mxu0 %v976
  %1029 = vmatprep.subr.mxu0 0.0
  %1030 = vmatpush1.msra.mxu0 %v975
  %1031 = vmatprep.subr.mxu0 0.0
  %1032 = vmatpush1.msra.mxu0 %v974
  %1033 = vmatprep.subr.mxu0 0.0
  %1034 = vmatpush1.msra.mxu0 %v973
  %1035 = vmatprep.subr.mxu0 0.0
  %1036 = vmatpush1.msra.mxu0 %v972
  %1037 = vmatprep.subr.mxu0 0.0
  %1038 = vmatpush1.msra.mxu0 %v971
  %1039 = vmatprep.subr.mxu0 0.0
  %1040 = vmatpush1.msra.mxu0 %v970
  %1041 = vmatprep.subr.mxu0 0.0
  %1042 = vmatpush1.msra.mxu0 %v969
  %1043 = vmatprep.subr.mxu0 0.0
  %1044 = vmatpush1.msra.mxu0 %v968
  %1045 = vmatprep.subr.mxu0 0.0
  %1046 = vmatpush1.msra.mxu0 %v967
  %1047 = vmatprep.subr.mxu0 0.0
  %1048 = vmatpush2.msra.mxu0 %v998
  %1049 = vmatprep.subr.mxu0 0.0
  %1050 = vmatpush2.msra.mxu0 %v997
  %1051 = vmatprep.subr.mxu0 0.0
  %1052 = vmatpush2.msra.mxu0 %v996
  %1053 = vmatprep.subr.mxu0 0.0
  %1054 = vmatpush2.msra.mxu0 %v995
  %1055 = vmatprep.subr.mxu0 0.0
  %1056 = vmatpush2.msra.mxu0 %v994
  %1057 = vmatprep.subr.mxu0 0.0
  %1058 = vmatpush2.msra.mxu0 %v993
  %1059 = vmatprep.subr.mxu0 0.0
  %1060 = vmatpush2.msra.mxu0 %v992
  %1061 = vmatprep.subr.mxu0 0.0
  %1062 = vmatpush2.msra.mxu0 %v991
  %1063 = vmatprep.subr.mxu0 0.0
  %1064 = vmatpush2.msra.mxu0 %v990
  %1065 = vmatprep.subr.mxu0 0.0
  %1066 = vmatpush2.msra.mxu0 %v989
  %1067 = vmatprep.subr.mxu0 0.0
  %1068 = vmatpush2.msra.mxu0 %v988
  %1069 = vmatprep.subr.mxu0 0.0
  %1070 = vmatpush2.msra.mxu0 %v987
  %1071 = vmatprep.subr.mxu0 0.0
  %1072 = vmatpush2.msra.mxu0 %v986
  %1073 = vmatprep.subr.mxu0 0.0
  %1074 = vmatpush2.msra.mxu0 %v985
  %1075 = vmatprep.subr.mxu0 0.0
  %1076 = vmatpush2.msra.mxu0 %v984
  %1077 = vmatprep.subr.mxu0 0.0
  %1078 = vmatpush2.msra.mxu0 %v983
  %1079 = vmatprep.mubr.f32.mxu0 %v962
  %1080 = vmatmul.mubr.f32.gmra.mxu0 %v961
  %v1081 = vpop.f32.mrf.mxu0
  %v1082 = vadd.f32 0.0, %v1081
  %v1083 = vpop.f32.mrf.mxu0
  %1084 = vdwg.mxu0
  %1085 = vmatprep.subr.mxu0 0.0
  %1086 = vmatpush1.msra.mxu0 %v1014
  %1087 = vmatprep.subr.mxu0 0.0
  %1088 = vmatpush1.msra.mxu0 %v1013
  %1089 = vmatprep.subr.mxu0 0.0
  %1090 = vmatpush1.msra.mxu0 %v1012
  %1091 = vmatprep.subr.mxu0 0.0
  %1092 = vmatpush1.msra.mxu0 %v1011
  %1093 = vmatprep.subr.mxu0 0.0
  %1094 = vmatpush1.msra.mxu0 %v1010
  %1095 = vmatprep.subr.mxu0 0.0
  %1096 = vmatpush1.msra.mxu0 %v1009
  %1097 = vmatprep.subr.mxu0 0.0
  %1098 = vmatpush1.msra.mxu0 %v1008
  %1099 = vmatprep.subr.mxu0 0.0
  %1100 = vmatpush1.msra.mxu0 %v1007
  %1101 = vmatprep.subr.mxu0 0.0
  %1102 = vmatpush1.msra.mxu0 %v1006
  %1103 = vmatprep.subr.mxu0 0.0
  %1104 = vmatpush1.msra.mxu0 %v1005
  %1105 = vmatprep.subr.mxu0 0.0
  %1106 = vmatpush1.msra.mxu0 %v1004
  %1107 = vmatprep.subr.mxu0 0.0
  %1108 = vmatpush1.msra.mxu0 %v1003
  %1109 = vmatprep.subr.mxu0 0.0
  %1110 = vmatpush1.msra.mxu0 %v1002
  %1111 = vmatprep.subr.mxu0 0.0
  %1112 = vmatpush1.msra.mxu0 %v1001
  %1113 = vmatprep.subr.mxu0 0.0
  %1114 = vmatpush1.msra.mxu0 %v1000
  %1115 = vmatprep.subr.mxu0 0.0
  %1116 = vmatpush1.msra.mxu0 %v999
  %1117 = vmatprep.subr.mxu0 0.0
  %1118 = vmatpush2.msra.mxu0 0.0
  %1119 = vmatprep.subr.mxu0 0.0
  %1120 = vmatpush2.msra.mxu0 0.0
  %1121 = vmatprep.subr.mxu0 0.0
  %1122 = vmatpush2.msra.mxu0 0.0
  %1123 = vmatprep.subr.mxu0 0.0
  %1124 = vmatpush2.msra.mxu0 0.0
  %1125 = vmatprep.subr.mxu0 0.0
  %1126 = vmatpush2.msra.mxu0 0.0
  %1127 = vmatprep.subr.mxu0 0.0
  %1128 = vmatpush2.msra.mxu0 0.0
  %1129 = vmatprep.subr.mxu0 0.0
  %1130 = vmatpush2.msra.mxu0 0.0
  %1131 = vmatprep.subr.mxu0 0.0
  %1132 = vmatpush2.msra.mxu0 0.0
  %1133 = vmatprep.subr.mxu0 0.0
  %1134 = vmatpush2.msra.mxu0 0.0
  %1135 = vmatprep.subr.mxu0 0.0
  %1136 = vmatpush2.msra.mxu0 0.0
  %1137 = vmatprep.subr.mxu0 0.0
  %1138 = vmatpush2.msra.mxu0 0.0
  %1139 = vmatprep.subr.mxu0 0.0
  %1140 = vmatpush2.msra.mxu0 0.0
  %1141 = vmatprep.subr.mxu0 0.0
  %1142 = vmatpush2.msra.mxu0 0.0
  %1143 = vmatprep.subr.mxu0 0.0
  %1144 = vmatpush2.msra.mxu0 0.0
  %1145 = vmatprep.subr.mxu0 0.0
  %1146 = vmatpush2.msra.mxu0 0.0
  %1147 = vmatprep.subr.mxu0 0.0
  %1148 = vmatpush2.msra.mxu0 0.0
  %1149 = vmatprep.mubr.f32.mxu0 0.0
  %1150 = vmatmul.mubr.f32.gmra.mxu0 %v963
  %v1151 = vpop.f32.mrf.mxu0
  %v1152 = vadd.f32 %v1082, %v1151
  %v1153 = vpop.f32.mrf.mxu0
  %1154 = vdwg.mxu0
  %1155 = vst [vmem:[%s9] sm:$0xff] %v1152
  %v1156 = vld [vmem:[%s4] sm:$0x1]
  %v1158 = vlaneseq
  %v1159 = vshrl.u32 %v1158, 7
  %v1160 = vsub.s32 0, %v1159
  %v1161 = vrot.slane %v1156, %v1160
  %v1163 = vadd.f32 %v1152, %v1161
  %v1164 = vmax.f32 %v1163, 0.0
  %1165 = vst [vmem:[%s10] sm:$0xff] %v1164
  %v1166 = vld [vmem:[%s5] sm:$0xff]
  %v1167 = vld [vmem:[%s5 + $0x8] sm:$0xff]
  %v1168 = vld [vmem:[%s5 + $0x10] sm:$0xff]
  %v1169 = vld [vmem:[%s5 + $0x18] sm:$0xff]
  %v1170 = vld [vmem:[%s5 + $0x20] sm:$0xff]
  %v1171 = vld [vmem:[%s5 + $0x28] sm:$0xff]
  %v1172 = vld [vmem:[%s5 + $0x30] sm:$0xff]
  %v1173 = vld [vmem:[%s5 + $0x38] sm:$0xff]
  %v1174 = vld [vmem:[%s5 + $0x40] sm:$0xff]
  %v1175 = vld [vmem:[%s5 + $0x48] sm:$0xff]
  %v1176 = vld [vmem:[%s5 + $0x50] sm:$0xff]
  %v1177 = vld [vmem:[%s5 + $0x58] sm:$0xff]
  %v1178 = vld [vmem:[%s5 + $0x60] sm:$0xff]
  %v1179 = vld [vmem:[%s5 + $0x68] sm:$0xff]
  %v1180 = vld [vmem:[%s5 + $0x70] sm:$0xff]
  %v1181 = vld [vmem:[%s5 + $0x78] sm:$0xff]
  %v1182 = vld [vmem:[%s6] sm:$0x1]
  %v1184 = vlaneseq
  %v1185 = vshrl.u32 %v1184, 7
  %v1186 = vsub.s32 0, %v1185
  %v1187 = vrot.slane %v1182, %v1186
  %1189 = vmatprep.subr.mxu0 0.0
  %1190 = vmatpush1.msra.mxu0 %v1181
  %1191 = vmatprep.subr.mxu0 0.0
  %1192 = vmatpush1.msra.mxu0 %v1180
  %1193 = vmatprep.subr.mxu0 0.0
  %1194 = vmatpush1.msra.mxu0 %v1179
  %1195 = vmatprep.subr.mxu0 0.0
  %1196 = vmatpush1.msra.mxu0 %v1178
  %1197 = vmatprep.subr.mxu0 0.0
  %1198 = vmatpush1.msra.mxu0 %v1177
  %1199 = vmatprep.subr.mxu0 0.0
  %1200 = vmatpush1.msra.mxu0 %v1176
  %1201 = vmatprep.subr.mxu0 0.0
  %1202 = vmatpush1.msra.mxu0 %v1175
  %1203 = vmatprep.subr.mxu0 0.0
  %1204 = vmatpush1.msra.mxu0 %v1174
  %1205 = vmatprep.subr.mxu0 0.0
  %1206 = vmatpush1.msra.mxu0 %v1173
  %1207 = vmatprep.subr.mxu0 0.0
  %1208 = vmatpush1.msra.mxu0 %v1172
  %1209 = vmatprep.subr.mxu0 0.0
  %1210 = vmatpush1.msra.mxu0 %v1171
  %1211 = vmatprep.subr.mxu0 0.0
  %1212 = vmatpush1.msra.mxu0 %v1170
  %1213 = vmatprep.subr.mxu0 0.0
  %1214 = vmatpush1.msra.mxu0 %v1169
  %1215 = vmatprep.subr.mxu0 0.0
  %1216 = vmatpush1.msra.mxu0 %v1168
  %1217 = vmatprep.subr.mxu0 0.0
  %1218 = vmatpush1.msra.mxu0 %v1167
  %1219 = vmatprep.subr.mxu0 0.0
  %1220 = vmatpush1.msra.mxu0 %v1166
  %1221 = vmatprep.subr.mxu0 0.0
  %1222 = vmatpush2.msra.mxu0 0.0
  %1223 = vmatprep.subr.mxu0 0.0
  %1224 = vmatpush2.msra.mxu0 0.0
  %1225 = vmatprep.subr.mxu0 0.0
  %1226 = vmatpush2.msra.mxu0 0.0
  %1227 = vmatprep.subr.mxu0 0.0
  %1228 = vmatpush2.msra.mxu0 0.0
  %1229 = vmatprep.subr.mxu0 0.0
  %1230 = vmatpush2.msra.mxu0 0.0
  %1231 = vmatprep.subr.mxu0 0.0
  %1232 = vmatpush2.msra.mxu0 0.0
  %1233 = vmatprep.subr.mxu0 0.0
  %1234 = vmatpush2.msra.mxu0 0.0
  %1235 = vmatprep.subr.mxu0 0.0
  %1236 = vmatpush2.msra.mxu0 0.0
  %1237 = vmatprep.subr.mxu0 0.0
  %1238 = vmatpush2.msra.mxu0 0.0
  %1239 = vmatprep.subr.mxu0 0.0
  %1240 = vmatpush2.msra.mxu0 0.0
  %1241 = vmatprep.subr.mxu0 0.0
  %1242 = vmatpush2.msra.mxu0 0.0
  %1243 = vmatprep.subr.mxu0 0.0
  %1244 = vmatpush2.msra.mxu0 0.0
  %1245 = vmatprep.subr.mxu0 0.0
  %1246 = vmatpush2.msra.mxu0 0.0
  %1247 = vmatprep.subr.mxu0 0.0
  %1248 = vmatpush2.msra.mxu0 0.0
  %1249 = vmatprep.subr.mxu0 0.0
  %1250 = vmatpush2.msra.mxu0 0.0
  %1251 = vmatprep.subr.mxu0 0.0
  %1252 = vmatpush2.msra.mxu0 0.0
  %1253 = vmatprep.mubr.f32.mxu0 0.0
  %1254 = vmatmul.mubr.f32.gmra.mxu0 %v1164
  %v1255 = vpop.f32.mrf.mxu0
  %v1256 = vadd.f32 %v1187, %v1255
  %v1257 = vpop.f32.mrf.mxu0
  %1258 = vdwg.mxu0
  %1259 = vst [vmem:[%s11] sm:$0xff] %v1256
  // Predicated region
  $region30: #{_forward_jit.1} parent=0 // pred_check
    _
  $region31: #{_forward_jit.1} parent=0 // pred_check_branch
    %1261 = sbr.rel (0) target = $region33
  $region32: #{_forward_jit.1} parent=0 // pred_region
    _
  $region33: #{_forward_jit.1} parent=0 // pred_fallthru
    _
  // Predicated region
  $region34: #{_forward_jit.1} parent=0 // pred_check
    _
  $region35: #{_forward_jit.1} parent=0 // pred_check_branch
    %1263 = sbr.rel (0) target = $region37
  $region36: #{_forward_jit.1} parent=0 // pred_region
    _
  $region37: #{_forward_jit.1} parent=0 // pred_fallthru
    _
  // Predicated region
  $region38: #{_forward_jit.1} parent=0 // pred_check
    _
  $region39: #{_forward_jit.1} parent=0 // pred_check_branch
    %1265 = sbr.rel (0) target = $region41
  $region40: #{_forward_jit.1} parent=0 // pred_region
    _
  $region41: #{_forward_jit.1} parent=0 // pred_fallthru
    _
  // Predicated region
  $region42: #{_forward_jit.1} parent=0 // pred_check
    _
  $region43: #{_forward_jit.1} parent=0 // pred_check_branch
    %1267 = sbr.rel (0) target = $region45
  $region44: #{_forward_jit.1} parent=0 // pred_region
    _
  $region45: #{_forward_jit.1} parent=0 // pred_fallthru
    _
  // Predicated region
  $region46: #{_forward_jit.1} parent=0 // pred_check
    _
  $region47: #{_forward_jit.1} parent=0 // pred_check_branch
    %1269 = sbr.rel (0) target = $region49
  $region48: #{_forward_jit.1} parent=0 // pred_region
    _
  $region49: #{_forward_jit.1} parent=0 // pred_fallthru
    _
  // Predicated region
  $region50: #{_forward_jit.1} parent=0 // pred_check
    _
  $region51: #{_forward_jit.1} parent=0 // pred_check_branch
    %1271 = sbr.rel (0) target = $region53
  $region52: #{_forward_jit.1} parent=0 // pred_region
    _
  $region53: #{_forward_jit.1} parent=0 // pred_fallthru
    _
  // Predicated region
  $region54: #{_forward_jit.1} parent=0 // pred_check
    _
  $region55: #{_forward_jit.1} parent=0 // pred_check_branch
    %1273 = sbr.rel (0) target = $region57
  $region56: #{_forward_jit.1} parent=0 // pred_region
    _
  $region57: #{_forward_jit.1} parent=0 // pred_fallthru
    _
  // Predicated region
  $region58: #{_forward_jit.1} parent=0 // pred_check
    _
  $region59: #{_forward_jit.1} parent=0 // pred_check_branch
    %1275 = sbr.rel (0) target = $region61
  $region60: #{_forward_jit.1} parent=0 // pred_region
    _
  $region61: #{_forward_jit.1} parent=0 // pred_fallthru
    _
  // Predicated region
  $region62: #{_forward_jit.1} parent=0 // pred_check
    _
  $region63: #{_forward_jit.1} parent=0 // pred_check_branch
    %1277 = sbr.rel (0) target = $region65
  $region64: #{_forward_jit.1} parent=0 // pred_region
    _
  $region65: #{_forward_jit.1} parent=0 // pred_fallthru
    _
  // Predicated region
  $region66: #{_forward_jit.1} parent=0 // pred_check
    _
  $region67: #{_forward_jit.1} parent=0 // pred_check_branch
    %1279 = sbr.rel (0) target = $region69
  $region68: #{_forward_jit.1} parent=0 // pred_region
    _
  $region69: #{_forward_jit.1} parent=0 // pred_fallthru
    _

</llo_original>
